<compile_context>
chip_gen: v7x
topology: tpu7x:2x2x1
jax: 0.10.0
libtpu: 0.0.40
codegen_flags: <defaults>
</compile_context>

<pallas_src>
import functools

import jax
import jax.numpy as jnp
import numpy as np
from jax.experimental import pallas as pl
from jax.experimental.pallas import tpu as pltpu

SIZE = 8              # scaled-down stand-in for size=64
D = SIZE ** 3         # flattened feature count (512)
H1 = 128              # stand-in for 1024
H2 = 128              # stand-in for 512
NK = 48               # minibatch-discrimination kernels (fixed by Linear(512 + 48, 1))
KD = 8                # minibatch kernel dim
NKKD = NK * KD        # 384
NKP = 128             # lane-padded NK (avoid 48-lane masked stores)
WCAT = H1 + NKKD      # fused [W1 | T] output width (512)
NEG_SLOPE = 0.2       # LeakyReLU(0.2)
TK = min(D, 2048)     # K tile; at size=64 (D=262144) this streams 2048-wide tiles
assert D % TK == 0


def discriminator3d_kernel(bp,
                           b_real_ref,                     # scalar prefetch (SMEM)
                           x_ref, w1t_ref, b1_ref, w2_ref, b2_ref,
                           g_ref, w3f_ref, w3m_ref, b3_ref,
                           out_ref, acc_ref):
    k = pl.program_id(0)

    # ---- init fused accumulator on first K tile (folds away when grid == 1) ----
    @pl.when(k == 0)
    def _init():
        acc_ref[...] = jnp.zeros_like(acc_ref)

    # ---- streamed K-tile matmul: x_k @ [W1 | T]_k (bf16 operands, f32 acc) ----
    acc_ref[...] += jnp.dot(x_ref[...], w1t_ref[...],
                            preferred_element_type=jnp.float32)

    # ---- epilogue on last K tile ----
    @pl.when(k == pl.num_programs(0) - 1)
    def _finalize():
        b_real = b_real_ref[0]
        acc = acc_ref[...]                                        # (bp, WCAT) f32

        # feature_extractor: Linear -> LeakyReLU -> Linear -> LeakyReLU
        h1 = acc[:, :H1] + b1_ref[...]                            # slice at lane-tile boundary
        h1 = jnp.where(h1 > 0, h1, NEG_SLOPE * h1)                # (bp, H1)
        h2 = jnp.dot(h1.astype(jnp.bfloat16), w2_ref[...],
                     preferred_element_type=jnp.float32) + b2_ref[...]
        h2 = jnp.where(h2 > 0, h2, NEG_SLOPE * h2)                # (bp, H2)

        # mini-batch discrimination (batched, lane-dense, no per-row Python loop)
        m = acc[:, H1:]                                           # (bp, NKKD)
        diff = jnp.abs(m[:, None, :] - m[None, :, :])             # (bp, bp, NKKD)
        diff = diff.reshape(bp * bp, NKKD)
        l1 = jnp.dot(diff, g_ref[...],
                     preferred_element_type=jnp.float32)          # (bp*bp, NKP)
        e = jnp.exp(-l1).reshape(bp, bp, NKP)
        # mask padded batch rows j >= b_real, then drop the self term exp(0) = 1
        j_ids = jax.lax.broadcasted_iota(jnp.int32, (bp, bp, NKP), 1)
        e = jnp.where(j_ids < b_real, e, 0.0)
        mb = e.sum(axis=1) - 1.0                                  # (bp, NKP)
        # Explicitly zero the padded lanes >= NK (G's zero columns give
        # exp(0)=1 sums there); do NOT rely on w3m's zero padding to cancel them.
        lane_ids = jax.lax.broadcasted_iota(jnp.int32, (bp, NKP), 1)
        mb = jnp.where(lane_ids < NK, mb, 0.0)

        # final layer: concat([h2, mb]) @ W3 + b3, then Sigmoid, done as two
        # broadcast-mul + lane reductions (VPU/XLU) instead of N=1 MXU matmuls.
        logit = (jnp.sum(h2 * w3f_ref[...], axis=-1, keepdims=True)
                 + jnp.sum(mb * w3m_ref[...], axis=-1, keepdims=True)
                 + b3_ref[...])                                   # (bp, 1)
        out_ref[...] = 1.0 / (1.0 + jnp.exp(-logit))


def discriminator3d_forward(x, params):
    w1, b1, w2, b2, t, g, w3f, w3m, b3 = params
    batch = x.shape[0]
    x_flat = x.reshape(batch, -1).astype(jnp.float32)             # x.view(B, -1)

    # Pad batch up to full sublanes; padded rows are masked inside the kernel.
    # TODO(synk): fusing real+fake GAN batches into one call (bp -> 128/256)
    # would amortize the W1|T stream over more rows at full size, but changes
    # the minibatch-discrimination statistics, so it is left to the caller.
    bp = max(8, ((batch + 7) // 8) * 8)
    x_pad = jnp.zeros((bp, D), jnp.float32).at[:batch].set(x_flat).astype(jnp.bfloat16)

    # Fuse the two streamed weights into one lane-dense bf16 slab: [W1 | T].
    w1t = jnp.concatenate([w1, t], axis=1).astype(jnp.bfloat16)   # (D, WCAT)
    w2_bf = w2.astype(jnp.bfloat16)

    n_k = D // TK
    kernel = functools.partial(discriminator3d_kernel, bp)

    # VMEM sizing: streamed double buffers + resident constants + accumulator,
    # with generous headroom, capped well below v7x's 64 MiB physical VMEM.
    stream_bytes = 2 * (bp * TK * 2 + TK * WCAT * 2)
    const_bytes = (H1 * 4 + H1 * H2 * 2 + H2 * 4 + NKKD * NKP * 4
                   + H2 * 4 + NKP * 4 + 4)
    acc_bytes = bp * WCAT * 4
    vmem_limit = int(min(max(4 * (stream_bytes + const_bytes + acc_bytes),
                             32 * 1024 * 1024),
                         48 * 1024 * 1024))

    cost = pl.CostEstimate(
        flops=2 * bp * D * WCAT + 2 * bp * H1 * H2 + 2 * bp * bp * NKKD * NKP,
        transcendentals=bp * bp * NKP + bp,
        bytes_accessed=(bp * D * 2 + D * WCAT * 2 + H1 * H2 * 2
                        + NKKD * NKP * 4 + bp * 4))

    out = pl.pallas_call(
        kernel,
        out_shape=jax.ShapeDtypeStruct((bp, 1), jnp.float32),
        grid_spec=pltpu.PrefetchScalarGridSpec(
            num_scalar_prefetch=1,                                 # b_real -> SMEM
            grid=(n_k,),
            in_specs=[
                pl.BlockSpec((bp, TK), lambda k, br: (0, k)),      # x   (streamed along K)
                pl.BlockSpec((TK, WCAT), lambda k, br: (k, 0)),    # [W1 | T] (streamed along K)
                pl.BlockSpec((1, H1), lambda k, br: (0, 0)),       # b1
                pl.BlockSpec((H1, H2), lambda k, br: (0, 0)),      # W2 (bf16)
                pl.BlockSpec((1, H2), lambda k, br: (0, 0)),       # b2
                pl.BlockSpec((NKKD, NKP), lambda k, br: (0, 0)),   # G (lane-padded group-sum)
                pl.BlockSpec((1, H2), lambda k, br: (0, 0)),       # W3 feature row
                pl.BlockSpec((1, NKP), lambda k, br: (0, 0)),      # W3 minibatch row (padded)
                pl.BlockSpec((1, 1), lambda k, br: (0, 0)),        # b3
            ],
            out_specs=pl.BlockSpec((bp, 1), lambda k, br: (0, 0)),
            scratch_shapes=[pltpu.VMEM((bp, WCAT), jnp.float32)],  # fused h1|m accumulator
        ),
        compiler_params=pltpu.CompilerParams(
            dimension_semantics=("arbitrary",),
            vmem_limit_bytes=vmem_limit),
        cost_estimate=cost,
    )(jnp.array([batch], jnp.int32), x_pad, w1t, b1, w2_bf, b2, g, w3f, w3m, b3)
    return out[:batch]


def init_params(key):
    ks = jax.random.split(key, 7)
    w1 = jax.random.normal(ks[0], (D, H1), jnp.float32) * 0.05
    b1 = jax.random.normal(ks[1], (1, H1), jnp.float32) * 0.01
    w2 = jax.random.normal(ks[2], (H1, H2), jnp.float32) * 0.05
    b2 = jax.random.normal(ks[3], (1, H2), jnp.float32) * 0.01
    t = jax.random.normal(ks[4], (D, NKKD), jnp.float32) * 0.05
    w3 = jax.random.normal(ks[5], (H2 + NK, 1), jnp.float32) * 0.05
    b3 = jax.random.normal(ks[6], (1, 1), jnp.float32) * 0.01
    w3f = w3[:H2, 0][None, :]                                          # (1, H2)
    w3m = jnp.zeros((1, NKP), jnp.float32).at[0, :NK].set(w3[H2:, 0])  # (1, NKP), zero-padded
    # block-diagonal group-sum matrix (NK*KD, NKP): column k sums kernel k's KD dims,
    # columns >= NK are zero (lane padding)
    g_core = jnp.repeat(jnp.eye(NK, dtype=jnp.float32), KD, axis=0)    # (NKKD, NK)
    g = jnp.zeros((NKKD, NKP), jnp.float32).at[:, :NK].set(g_core)
    return (w1, b1, w2, b2, t, g, w3f, w3m, b3)


def reference_forward(x, params):
    """Pure-JAX reference mirroring the PyTorch module (full f32 precision)."""
    w1, b1, w2, b2, t, g, w3f, w3m, b3 = params
    batch = x.shape[0]
    xf = x.reshape(batch, -1).astype(jnp.float32)
    hp = jax.lax.Precision.HIGHEST
    h1 = jax.nn.leaky_relu(jnp.dot(xf, w1, precision=hp) + b1, NEG_SLOPE)
    h2 = jax.nn.leaky_relu(jnp.dot(h1, w2, precision=hp) + b2, NEG_SLOPE)
    m = jnp.dot(xf, t, precision=hp).reshape(batch, NK, KD)
    l1 = jnp.abs(m[:, None, :, :] - m[None, :, :, :]).sum(-1)          # (B, B, NK)
    mb = jnp.exp(-l1).sum(axis=1) - 1.0                                # (B, NK)
    logit = (jnp.dot(h2, w3f.T, precision=hp)
             + jnp.dot(mb, w3m[:, :NK].T, precision=hp) + b3)
    return jax.nn.sigmoid(logit)


if __name__ == "__main__":
    key = jax.random.PRNGKey(0)
    k_x, k_p = jax.random.split(key)
    x = jax.random.normal(k_x, (2, SIZE, SIZE, SIZE), jnp.float32)     # (B, S, S, S) 3-D volume
    params = init_params(k_p)

    out = jax.block_until_ready(discriminator3d_forward(x, params))
    ref = jax.block_until_ready(reference_forward(x, params))
    np.testing.assert_allclose(np.asarray(out), np.asarray(ref), rtol=2e-2, atol=2e-2)

    print("KERNEL_OK")
</pallas_src>

<mosaic_0001>
module attributes {stable_mosaic.version = 11 : i64} {
  func.func @discriminator3d_kernel(%arg0: i32, %arg1: memref<1xi32, #tpu.memory_space<smem>>, %arg2: memref<8x512xbf16, #tpu.memory_space<vmem>>, %arg3: memref<512x512xbf16, #tpu.memory_space<vmem>>, %arg4: memref<1x128xf32, #tpu.memory_space<vmem>>, %arg5: memref<128x128xbf16, #tpu.memory_space<vmem>>, %arg6: memref<1x128xf32, #tpu.memory_space<vmem>>, %arg7: memref<384x128xf32, #tpu.memory_space<vmem>>, %arg8: memref<1x128xf32, #tpu.memory_space<vmem>>, %arg9: memref<1x128xf32, #tpu.memory_space<vmem>>, %arg10: memref<1x1xf32, #tpu.memory_space<vmem>>, %arg11: memref<8x1xf32, #tpu.memory_space<vmem>>, %arg12: memref<8x512xf32, #tpu.memory_space<vmem>>) attributes {dimension_semantics = [#tpu.dimension_semantics<arbitrary>], iteration_bounds = array<i64: 1>, scalar_prefetch = 1 : i64, scratch_operands = 1 : i64, tpu.core_type = #tpu.core_type<tc>, window_params = [{transform_indices = @transform_0, window_bounds = array<i64: 8, 512>}, {transform_indices = @transform_1, window_bounds = array<i64: 512, 512>}, {pipeline_mode = #tpu.pipeline_mode<synchronous>, transform_indices = @transform_2, window_bounds = array<i64: 1, 128>}, {pipeline_mode = #tpu.pipeline_mode<synchronous>, transform_indices = @transform_3, window_bounds = array<i64: 128, 128>}, {pipeline_mode = #tpu.pipeline_mode<synchronous>, transform_indices = @transform_4, window_bounds = array<i64: 1, 128>}, {pipeline_mode = #tpu.pipeline_mode<synchronous>, transform_indices = @transform_5, window_bounds = array<i64: 384, 128>}, {pipeline_mode = #tpu.pipeline_mode<synchronous>, transform_indices = @transform_6, window_bounds = array<i64: 1, 128>}, {pipeline_mode = #tpu.pipeline_mode<synchronous>, transform_indices = @transform_7, window_bounds = array<i64: 1, 128>}, {pipeline_mode = #tpu.pipeline_mode<synchronous>, transform_indices = @transform_8, window_bounds = array<i64: 1, 1>}, {pipeline_mode = #tpu.pipeline_mode<synchronous>, transform_indices = @transform_9, window_bounds = array<i64: 8, 1>}]} {
    %c0_i32 = arith.constant 0 : i32
    %0 = arith.cmpi eq, %arg0, %c0_i32 : i32
    %1 = arith.extui %0 : i1 to i32
    %c0_i32_0 = arith.constant 0 : i32
    %2 = arith.cmpi ne, %1, %c0_i32_0 : i32
    scf.if %2 {
      %cst_10 = arith.constant 0.000000e+00 : f32
      %12 = vector.broadcast %cst_10 : f32 to vector<8x512xf32>
      %c0_11 = arith.constant 0 : index
      %c0_12 = arith.constant 0 : index
      %13 = vector.load %arg12[%c0_11, %c0_12] : memref<8x512xf32, #tpu.memory_space<vmem>>, vector<8x512xf32>
      tpu.vector_store %arg12[%c0_11, %c0_12], %12 {strides = array<i32>} : memref<8x512xf32, #tpu.memory_space<vmem>>, vector<8x512xf32>,
    } else {
    }
    %c0 = arith.constant 0 : index
    %c0_1 = arith.constant 0 : index
    %3 = vector.load %arg12[%c0, %c0_1] : memref<8x512xf32, #tpu.memory_space<vmem>>, vector<8x512xf32>
    %c0_2 = arith.constant 0 : index
    %c0_3 = arith.constant 0 : index
    %4 = vector.load %arg2[%c0_2, %c0_3] : memref<8x512xbf16, #tpu.memory_space<vmem>>, vector<8x512xbf16>
    %c0_4 = arith.constant 0 : index
    %c0_5 = arith.constant 0 : index
    %5 = vector.load %arg3[%c0_4, %c0_5] : memref<512x512xbf16, #tpu.memory_space<vmem>>, vector<512x512xbf16>
    %cst = arith.constant dense<0.000000e+00> : vector<8x512xf32>
    %6 = tpu.matmul %4, %5, %cst {dimension_numbers = #tpu.dot_dimension_numbers<[1], [0], [0], [1], [0, 0, 1, 1], [], []>} : vector<8x512xbf16>, vector<512x512xbf16>, vector<8x512xf32> -> vector<8x512xf32>
    %7 = arith.addf %3, %6 : vector<8x512xf32>
    %c0_6 = arith.constant 0 : index
    %c0_7 = arith.constant 0 : index
    %8 = vector.load %arg12[%c0_6, %c0_7] : memref<8x512xf32, #tpu.memory_space<vmem>>, vector<8x512xf32>
    tpu.vector_store %arg12[%c0_6, %c0_7], %7 {strides = array<i32>} : memref<8x512xf32, #tpu.memory_space<vmem>>, vector<8x512xf32>,
    %c0_i32_8 = arith.constant 0 : i32
    %9 = arith.cmpi eq, %arg0, %c0_i32_8 : i32
    %10 = arith.extui %9 : i1 to i32
    %c0_i32_9 = arith.constant 0 : i32
    %11 = arith.cmpi ne, %10, %c0_i32_9 : i32
    scf.if %11 {
      %c0_10 = arith.constant 0 : index
      %12 = memref.load %arg1[%c0_10] : memref<1xi32, #tpu.memory_space<smem>>
      %c0_11 = arith.constant 0 : index
      %c0_12 = arith.constant 0 : index
      %13 = vector.load %arg12[%c0_11, %c0_12] : memref<8x512xf32, #tpu.memory_space<vmem>>, vector<8x512xf32>
      %14 = vector.extract_strided_slice %13 {offsets = [0, 0], sizes = [8, 128], strides = [1, 1]} : vector<8x512xf32> to vector<8x128xf32>
      %c0_13 = arith.constant 0 : index
      %c0_14 = arith.constant 0 : index
      %15 = vector.load %arg4[%c0_13, %c0_14] : memref<1x128xf32, #tpu.memory_space<vmem>>, vector<1x128xf32>
      %16 = vector.broadcast %15 : vector<1x128xf32> to vector<8x128xf32>
      %17 = arith.addf %14, %16 : vector<8x128xf32>
      %cst_15 = arith.constant 0.000000e+00 : f32
      %18 = vector.broadcast %cst_15 : f32 to vector<8x128xf32>
      %19 = arith.cmpf ogt, %17, %18 : vector<8x128xf32>
      %cst_16 = arith.constant 2.000000e-01 : f32
      %20 = vector.broadcast %cst_16 : f32 to vector<8x128xf32>
      %21 = arith.mulf %20, %17 : vector<8x128xf32>
      %22 = arith.select %19, %17, %21 : vector<8x128xi1>, vector<8x128xf32>
      %23 = arith.truncf %22 : vector<8x128xf32> to vector<8x128xbf16>
      %c0_17 = arith.constant 0 : index
      %c0_18 = arith.constant 0 : index
      %24 = vector.load %arg5[%c0_17, %c0_18] : memref<128x128xbf16, #tpu.memory_space<vmem>>, vector<128x128xbf16>
      %cst_19 = arith.constant dense<0.000000e+00> : vector<8x128xf32>
      %25 = tpu.matmul %23, %24, %cst_19 {dimension_numbers = #tpu.dot_dimension_numbers<[1], [0], [0], [1], [0, 0, 1, 1], [], []>} : vector<8x128xbf16>, vector<128x128xbf16>, vector<8x128xf32> -> vector<8x128xf32>
      %c0_20 = arith.constant 0 : index
      %c0_21 = arith.constant 0 : index
      %26 = vector.load %arg6[%c0_20, %c0_21] : memref<1x128xf32, #tpu.memory_space<vmem>>, vector<1x128xf32>
      %27 = vector.broadcast %26 : vector<1x128xf32> to vector<8x128xf32>
      %28 = arith.addf %25, %27 : vector<8x128xf32>
      %cst_22 = arith.constant 0.000000e+00 : f32
      %29 = vector.broadcast %cst_22 : f32 to vector<8x128xf32>
      %30 = arith.cmpf ogt, %28, %29 : vector<8x128xf32>
      %cst_23 = arith.constant 2.000000e-01 : f32
      %31 = vector.broadcast %cst_23 : f32 to vector<8x128xf32>
      %32 = arith.mulf %31, %28 : vector<8x128xf32>
      %33 = arith.select %30, %28, %32 : vector<8x128xi1>, vector<8x128xf32>
      %34 = vector.extract_strided_slice %13 {offsets = [0, 128], sizes = [8, 384], strides = [1, 1]} : vector<8x512xf32> to vector<8x384xf32>
      %35 = vector.shape_cast %34 : vector<8x384xf32> to vector<8x1x384xf32>
      %36 = vector.shape_cast %34 : vector<8x384xf32> to vector<1x8x384xf32>
      %37 = vector.broadcast %35 : vector<8x1x384xf32> to vector<8x8x384xf32>
      %38 = vector.broadcast %36 : vector<1x8x384xf32> to vector<8x8x384xf32>
      %39 = arith.subf %37, %38 : vector<8x8x384xf32>
      %40 = math.absf %39 : vector<8x8x384xf32>
      %41 = vector.shape_cast %40 : vector<8x8x384xf32> to vector<64x384xf32>
      %c0_24 = arith.constant 0 : index
      %c0_25 = arith.constant 0 : index
      %42 = vector.load %arg7[%c0_24, %c0_25] : memref<384x128xf32, #tpu.memory_space<vmem>>, vector<384x128xf32>
      %cst_26 = arith.constant dense<0.000000e+00> : vector<64x128xf32>
      %43 = tpu.matmul %41, %42, %cst_26 {dimension_numbers = #tpu.dot_dimension_numbers<[1], [0], [0], [1], [0, 0, 1, 1], [], []>} : vector<64x384xf32>, vector<384x128xf32>, vector<64x128xf32> -> vector<64x128xf32>
      %cst_27 = arith.constant 0.000000e+00 : f32
      %44 = vector.broadcast %cst_27 : f32 to vector<64x128xf32>
      %45 = arith.subf %44, %43 : vector<64x128xf32>
      %46 = math.exp %45 : vector<64x128xf32>
      %47 = vector.shape_cast %46 : vector<64x128xf32> to vector<8x8x128xf32>
      %48 = tpu.iota {dimensions = array<i32: 1>} : vector<8x8x128xi32>
      %49 = vector.broadcast %12 : i32 to vector<8x8x128xi32>
      %50 = arith.cmpi slt, %48, %49 : vector<8x8x128xi32>
      %cst_28 = arith.constant 0.000000e+00 : f32
      %51 = vector.broadcast %cst_28 : f32 to vector<8x8x128xf32>
      %52 = arith.select %50, %47, %51 : vector<8x8x128xi1>, vector<8x8x128xf32>
      %cst_29 = arith.constant dense<0.000000e+00> : vector<8x128xf32>
      %53 = vector.multi_reduction <add>, %52, %cst_29 [1] : vector<8x8x128xf32> to vector<8x128xf32>
      %cst_30 = arith.constant 1.000000e+00 : f32
      %54 = vector.broadcast %cst_30 : f32 to vector<8x128xf32>
      %55 = arith.subf %53, %54 : vector<8x128xf32>
      %56 = tpu.iota {dimensions = array<i32: 1>} : vector<8x128xi32>
      %c48_i32 = arith.constant 48 : i32
      %57 = vector.broadcast %c48_i32 : i32 to vector<8x128xi32>
      %58 = arith.cmpi slt, %56, %57 : vector<8x128xi32>
      %cst_31 = arith.constant 0.000000e+00 : f32
      %59 = vector.broadcast %cst_31 : f32 to vector<8x128xf32>
      %60 = arith.select %58, %55, %59 : vector<8x128xi1>, vector<8x128xf32>
      %c0_32 = arith.constant 0 : index
      %c0_33 = arith.constant 0 : index
      %61 = vector.load %arg8[%c0_32, %c0_33] : memref<1x128xf32, #tpu.memory_space<vmem>>, vector<1x128xf32>
      %62 = vector.broadcast %61 : vector<1x128xf32> to vector<8x128xf32>
      %63 = arith.mulf %33, %62 : vector<8x128xf32>
      %cst_34 = arith.constant dense<0.000000e+00> : vector<8xf32>
      %64 = vector.multi_reduction <add>, %63, %cst_34 [1] : vector<8x128xf32> to vector<8xf32>
      %65 = vector.shape_cast %64 : vector<8xf32> to vector<8x1xf32>
      %c0_35 = arith.constant 0 : index
      %c0_36 = arith.constant 0 : index
      %66 = vector.load %arg9[%c0_35, %c0_36] : memref<1x128xf32, #tpu.memory_space<vmem>>, vector<1x128xf32>
      %67 = vector.broadcast %66 : vector<1x128xf32> to vector<8x128xf32>
      %68 = arith.mulf %60, %67 : vector<8x128xf32>
      %cst_37 = arith.constant dense<0.000000e+00> : vector<8xf32>
      %69 = vector.multi_reduction <add>, %68, %cst_37 [1] : vector<8x128xf32> to vector<8xf32>
      %70 = vector.shape_cast %69 : vector<8xf32> to vector<8x1xf32>
      %71 = arith.addf %65, %70 : vector<8x1xf32>
      %c0_38 = arith.constant 0 : index
      %c0_39 = arith.constant 0 : index
      %72 = vector.load %arg10[%c0_38, %c0_39] : memref<1x1xf32, #tpu.memory_space<vmem>>, vector<1x1xf32>
      %73 = vector.broadcast %72 : vector<1x1xf32> to vector<8x1xf32>
      %74 = arith.addf %71, %73 : vector<8x1xf32>
      %cst_40 = arith.constant 0.000000e+00 : f32
      %75 = vector.broadcast %cst_40 : f32 to vector<8x1xf32>
      %76 = arith.subf %75, %74 : vector<8x1xf32>
      %77 = math.exp %76 : vector<8x1xf32>
      %cst_41 = arith.constant 1.000000e+00 : f32
      %78 = vector.broadcast %cst_41 : f32 to vector<8x1xf32>
      %79 = arith.addf %78, %77 : vector<8x1xf32>
      %cst_42 = arith.constant 1.000000e+00 : f32
      %80 = vector.broadcast %cst_42 : f32 to vector<8x1xf32>
      %81 = arith.divf %80, %79 : vector<8x1xf32>
      %c0_43 = arith.constant 0 : index
      %c0_44 = arith.constant 0 : index
      %82 = vector.load %arg11[%c0_43, %c0_44] : memref<8x1xf32, #tpu.memory_space<vmem>>, vector<8x1xf32>
      tpu.vector_store %arg11[%c0_43, %c0_44], %81 {strides = array<i32>} : memref<8x1xf32, #tpu.memory_space<vmem>>, vector<8x1xf32>,
    } else {
    }
    return
  }
  func.func @transform_0(%arg0: i32, %arg1: memref<1xi32, #tpu.memory_space<smem>>) -> (i32, i32) {
    %c0_i32 = arith.constant 0 : i32
    %c0_i32_0 = arith.constant 0 : i32
    return %c0_i32, %arg0 : i32, i32
  }
  func.func @transform_1(%arg0: i32, %arg1: memref<1xi32, #tpu.memory_space<smem>>) -> (i32, i32) {
    %c0_i32 = arith.constant 0 : i32
    %c0_i32_0 = arith.constant 0 : i32
    return %arg0, %c0_i32 : i32, i32
  }
  func.func @transform_2(%arg0: i32, %arg1: memref<1xi32, #tpu.memory_space<smem>>) -> (i32, i32) {
    %c0_i32 = arith.constant 0 : i32
    %c0_i32_0 = arith.constant 0 : i32
    %c0_i32_1 = arith.constant 0 : i32
    return %c0_i32, %c0_i32_0 : i32, i32
  }
  func.func @transform_3(%arg0: i32, %arg1: memref<1xi32, #tpu.memory_space<smem>>) -> (i32, i32) {
    %c0_i32 = arith.constant 0 : i32
    %c0_i32_0 = arith.constant 0 : i32
    %c0_i32_1 = arith.constant 0 : i32
    return %c0_i32, %c0_i32_0 : i32, i32
  }
  func.func @transform_4(%arg0: i32, %arg1: memref<1xi32, #tpu.memory_space<smem>>) -> (i32, i32) {
    %c0_i32 = arith.constant 0 : i32
    %c0_i32_0 = arith.constant 0 : i32
    %c0_i32_1 = arith.constant 0 : i32
    return %c0_i32, %c0_i32_0 : i32, i32
  }
  func.func @transform_5(%arg0: i32, %arg1: memref<1xi32, #tpu.memory_space<smem>>) -> (i32, i32) {
    %c0_i32 = arith.constant 0 : i32
    %c0_i32_0 = arith.constant 0 : i32
    %c0_i32_1 = arith.constant 0 : i32
    return %c0_i32, %c0_i32_0 : i32, i32
  }
  func.func @transform_6(%arg0: i32, %arg1: memref<1xi32, #tpu.memory_space<smem>>) -> (i32, i32) {
    %c0_i32 = arith.constant 0 : i32
    %c0_i32_0 = arith.constant 0 : i32
    %c0_i32_1 = arith.constant 0 : i32
    return %c0_i32, %c0_i32_0 : i32, i32
  }
  func.func @transform_7(%arg0: i32, %arg1: memref<1xi32, #tpu.memory_space<smem>>) -> (i32, i32) {
    %c0_i32 = arith.constant 0 : i32
    %c0_i32_0 = arith.constant 0 : i32
    %c0_i32_1 = arith.constant 0 : i32
    return %c0_i32, %c0_i32_0 : i32, i32
  }
  func.func @transform_8(%arg0: i32, %arg1: memref<1xi32, #tpu.memory_space<smem>>) -> (i32, i32) {
    %c0_i32 = arith.constant 0 : i32
    %c0_i32_0 = arith.constant 0 : i32
    %c0_i32_1 = arith.constant 0 : i32
    return %c0_i32, %c0_i32_0 : i32, i32
  }
  func.func @transform_9(%arg0: i32, %arg1: memref<1xi32, #tpu.memory_space<smem>>) -> (i32, i32) {
    %c0_i32 = arith.constant 0 : i32
    %c0_i32_0 = arith.constant 0 : i32
    %c0_i32_1 = arith.constant 0 : i32
    return %c0_i32, %c0_i32_0 : i32, i32
  }
}

</mosaic_0001>

<llo_original>
// kernel: tpu_custom_call.1
$region0: #{tpu_custom_call.1}
  #allocation0 [shape = 'u32[]', space=smem, size = 0x4, offset = 0x4, fixed_abs, tag = 'smem constant byte address 0x4 - core index']
  #allocation1 [shape = 'u32[144,128]{1,0:T(1,128)}', space=vmem, size = 0x12000, scoped, tag = 'internal scratch']
  #allocation2 [shape = 'f32[8,512]{1,0:T(8,128)}', space=vmem, size = 0x4000, scoped, tag = 'scratch operand']
  #allocation3 [shape = 's32[1]{0}', space=sflag, size = 0x4, scoped, tag = 'scoped memory for tpu_custom_call.1']
  #allocation4 [shape = 's32[1]{0:T(128)S(6)}', space=smem, size = 0x200, scoped, tag = 'prefetched SMEM operand 0']
  #allocation5 [shape = 'f32[1,1]{1,0:T(1,128)S(1)}', space=vmem, size = 0x200, scoped, tag = 'scoped memory for tpu_custom_call.1']
  %s0 = inlined_call_operand.<no memory space> [shape: s32[1], index: 0, kind: input, shape index: {}]
  %s1 = inlined_call_operand.hbm [shape: bf16[8,512], index: 1, kind: input, shape index: {}]
  %s2 = inlined_call_operand.hbm [shape: bf16[512,512], index: 2, kind: input, shape index: {}]
  %s3 = inlined_call_operand.vmem [shape: f32[1,128], index: 3, kind: input, shape index: {}]
  %s4 = inlined_call_operand.hbm [shape: bf16[128,128], index: 4, kind: input, shape index: {}]
  %s5 = inlined_call_operand.vmem [shape: f32[1,128], index: 5, kind: input, shape index: {}]
  %s6 = inlined_call_operand.hbm [shape: f32[384,128], index: 6, kind: input, shape index: {}]
  %s7 = inlined_call_operand.vmem [shape: f32[1,128], index: 7, kind: input, shape index: {}]
  %s8 = inlined_call_operand.vmem [shape: f32[1,128], index: 8, kind: input, shape index: {}]
  %s9 = inlined_call_operand.<no memory space> [shape: f32[1,1], index: 9, kind: input, shape index: {}]
  %s10 = inlined_call_operand.vmem [shape: f32[8,1], index: 10, kind: output, shape index: {}]
  %s11 = sld [smem:[#allocation0]]
  $region70: #{tpu_custom_call.1} parent=0
    _
  %s13 = ssub.s32 1, %s11
  %s14 = scalar_select 0, %s13, %s11
  %15 = sst [smem:[#allocation4]] %s0
  %v16 = vstv %s9
  %17 = vst [vmem:[#allocation5] sm:$0x1] %v16
  $region1: #{tpu_custom_call.1} parent=0
    #allocation6 [shape = 'u8[8192]{0}', space=vmem, size = 0x2000, scoped, tag = 'input window, operand 1, single buffered']
    #allocation7 [shape = 's32[1]{0}', space=sflag, size = 0x4, scoped, tag = 'scoped memory for tpu_custom_call.1']
    #allocation8 [shape = 'u8[524288]{0}', space=vmem, size = 0x80000, scoped, tag = 'input window, operand 2, single buffered']
    #allocation9 [shape = 's32[1]{0}', space=sflag, size = 0x4, scoped, tag = 'scoped memory for tpu_custom_call.1']
    #allocation10 [shape = 'u8[32768]{0}', space=vmem, size = 0x8000, scoped, tag = 'input window, operand 4, single buffered']
    #allocation11 [shape = 'u8[196608]{0}', space=vmem, size = 0x30000, scoped, tag = 'input window, operand 6, single buffered']
    #allocation12 [shape = 's32[1]{0}', space=sflag, size = 0x4, scoped, tag = 'scoped memory for tpu_custom_call.1']
    %18 = vsyncpa [#allocation7], 0
    %19 = vsyncpa [#allocation9], 0
    %20 = vsyncpa [#allocation12], 0
    // Predicated region
    $region2: #{tpu_custom_call.1} parent=1 // pred_check
      _
    $region3: #{tpu_custom_call.1} parent=1 // pred_check_branch
      %22 = sbr.rel (0) target = $region5
    $region4: #{tpu_custom_call.1} parent=1 // pred_region
      %s24 = ssub.s32 256, 256
      %25 = vsyncadd [#allocation7], %s24
      %s27 = sshll.u32 [#allocation6], 4
      %s28 = int_to_ptr.vmem [resolvable:$true] %s27
      %30 = dma.hbm_to_vmem [thread:$0]  %s1, 256, %s28, [#allocation7]
    $region5: #{tpu_custom_call.1} parent=1 // pred_fallthru
      _
    // Predicated region
    $region6: #{tpu_custom_call.1} parent=1 // pred_check
      _
    $region7: #{tpu_custom_call.1} parent=1 // pred_check_branch
      %32 = sbr.rel (0) target = $region9
    $region8: #{tpu_custom_call.1} parent=1 // pred_region
      %s34 = ssub.s32 16384, 16384
      %35 = vsyncadd [#allocation9], %s34
      %s36 = sshll.u32 [#allocation8], 4
      %s37 = int_to_ptr.vmem [resolvable:$true] %s36
      %42 = dma.hbm_to_vmem [thread:$0]  %s2, 16384, %s37, [#allocation9], 256, 256, 16
    $region9: #{tpu_custom_call.1} parent=1 // pred_fallthru
      _
    // Predicated region
    $region10: #{tpu_custom_call.1} parent=1 // pred_check
      _
    $region11: #{tpu_custom_call.1} parent=1 // pred_check_branch
      %44 = sbr.rel (0) target = $region13
    $region12: #{tpu_custom_call.1} parent=1 // pred_region
      _
    $region13: #{tpu_custom_call.1} parent=1 // pred_fallthru
      _
    // Predicated region
    $region14: #{tpu_custom_call.1} parent=1 // pred_check
      _
    $region15: #{tpu_custom_call.1} parent=1 // pred_check_branch
      %46 = sbr.rel (0) target = $region17
    $region16: #{tpu_custom_call.1} parent=1 // pred_region
      %s48 = ssub.s32 1024, 1024
      %49 = vsyncadd [#allocation9], %s48
      %s50 = sshll.u32 [#allocation10], 4
      %s51 = int_to_ptr.vmem [resolvable:$true] %s50
      %56 = dma.hbm_to_vmem [thread:$0]  %s4, 1024, %s51, [#allocation9], 64, 64, 4
    $region17: #{tpu_custom_call.1} parent=1 // pred_fallthru
      _
    // Predicated region
    $region18: #{tpu_custom_call.1} parent=1 // pred_check
      _
    $region19: #{tpu_custom_call.1} parent=1 // pred_check_branch
      %58 = sbr.rel (0) target = $region21
    $region20: #{tpu_custom_call.1} parent=1 // pred_region
      _
    $region21: #{tpu_custom_call.1} parent=1 // pred_fallthru
      _
    // Predicated region
    $region22: #{tpu_custom_call.1} parent=1 // pred_check
      _
    $region23: #{tpu_custom_call.1} parent=1 // pred_check_branch
      %60 = sbr.rel (0) target = $region25
    $region24: #{tpu_custom_call.1} parent=1 // pred_region
      %s62 = ssub.s32 6144, 6144
      %63 = vsyncadd [#allocation12], %s62
      %s64 = sshll.u32 [#allocation11], 4
      %s65 = int_to_ptr.vmem [resolvable:$true] %s64
      %70 = dma.hbm_to_vmem [thread:$0]  %s6, 6144, %s65, [#allocation12], 128, 128, 8
    $region25: #{tpu_custom_call.1} parent=1 // pred_fallthru
      _
    // Predicated region
    $region26: #{tpu_custom_call.1} parent=1 // pred_check
      _
    $region27: #{tpu_custom_call.1} parent=1 // pred_check_branch
      %72 = sbr.rel (0) target = $region29
    $region28: #{tpu_custom_call.1} parent=1 // pred_region
      _
    $region29: #{tpu_custom_call.1} parent=1 // pred_fallthru
      _
    // Predicated region
    $region30: #{tpu_custom_call.1} parent=1 // pred_check
      _
    $region31: #{tpu_custom_call.1} parent=1 // pred_check_branch
      %74 = sbr.rel (0) target = $region33
    $region32: #{tpu_custom_call.1} parent=1 // pred_region
      _
    $region33: #{tpu_custom_call.1} parent=1 // pred_fallthru
      _
    // Predicated region
    $region34: #{tpu_custom_call.1} parent=1 // pred_check
      _
    $region35: #{tpu_custom_call.1} parent=1 // pred_check_branch
      %76 = sbr.rel (0) target = $region37
    $region36: #{tpu_custom_call.1} parent=1 // pred_region
      _
    $region37: #{tpu_custom_call.1} parent=1 // pred_fallthru
      _
    // Predicated region
    $region38: #{tpu_custom_call.1} parent=1 // pred_check
      _
    $region39: #{tpu_custom_call.1} parent=1 // pred_check_branch
      %78 = sbr.rel (0) target = $region41
    $region40: #{tpu_custom_call.1} parent=1 // pred_region
      %79 = dma.done [#allocation7], 256
    $region41: #{tpu_custom_call.1} parent=1 // pred_fallthru
      _
    // Predicated region
    $region42: #{tpu_custom_call.1} parent=1 // pred_check
      _
    $region43: #{tpu_custom_call.1} parent=1 // pred_check_branch
      %81 = sbr.rel (0) target = $region45
    $region44: #{tpu_custom_call.1} parent=1 // pred_region
      %82 = dma.done [#allocation9], 16384
    $region45: #{tpu_custom_call.1} parent=1 // pred_fallthru
      _
    // Predicated region
    $region46: #{tpu_custom_call.1} parent=1 // pred_check
      _
    $region47: #{tpu_custom_call.1} parent=1 // pred_check_branch
      %84 = sbr.rel (0) target = $region49
    $region48: #{tpu_custom_call.1} parent=1 // pred_region
      %85 = dma.done [#allocation9], 1024
    $region49: #{tpu_custom_call.1} parent=1 // pred_fallthru
      _
    // Predicated region
    $region50: #{tpu_custom_call.1} parent=1 // pred_check
      _
    $region51: #{tpu_custom_call.1} parent=1 // pred_check_branch
      %87 = sbr.rel (0) target = $region53
    $region52: #{tpu_custom_call.1} parent=1 // pred_region
      %88 = dma.done [#allocation12], 6144
    $region53: #{tpu_custom_call.1} parent=1 // pred_fallthru
      _
    %p90 = scmp.eq.s32.totalorder 0, 0
    // Predicated region
    $region54: #{tpu_custom_call.1} parent=1 // pred_check
      %p91 = pneg %p90
    $region55: #{tpu_custom_call.1} parent=1 // pred_check_branch
      %93 = sbr.rel (%p91) target = $region57
    $region56: #{tpu_custom_call.1} parent=1 // pred_region
      %94 = vst [vmem:[#allocation2] sm:$0xff] 0.0
      %95 = vst [vmem:[#allocation2 + $0x8] sm:$0xff] 0.0
      %96 = vst [vmem:[#allocation2 + $0x10] sm:$0xff] 0.0
      %97 = vst [vmem:[#allocation2 + $0x18] sm:$0xff] 0.0
    $region57: #{tpu_custom_call.1} parent=1 // pred_fallthru
      _
    %v98 = vld [vmem:[#allocation2] sm:$0xff]
    %v99 = vld [vmem:[#allocation2 + $0x8] sm:$0xff]
    %v100 = vld [vmem:[#allocation2 + $0x10] sm:$0xff]
    %v101 = vld [vmem:[#allocation2 + $0x18] sm:$0xff]
    %v102 = vld [vmem:[#allocation6] sm:$0xff]
    %v103 = vld [vmem:[#allocation6 + $0x8] sm:$0xff]
    %v104 = vld [vmem:[#allocation8] sm:$0xff]
    %v105 = vld [vmem:[#allocation8 + $0x8] sm:$0xff]
    %v106 = vld [vmem:[#allocation8 + $0x10] sm:$0xff]
    %v107 = vld [vmem:[#allocation8 + $0x18] sm:$0xff]
    %v108 = vld [vmem:[#allocation8 + $0x20] sm:$0xff]
    %v109 = vld [vmem:[#allocation8 + $0x28] sm:$0xff]
    %v110 = vld [vmem:[#allocation8 + $0x30] sm:$0xff]
    %v111 = vld [vmem:[#allocation8 + $0x38] sm:$0xff]
    %v112 = vld [vmem:[#allocation8 + $0x40] sm:$0xff]
    %v113 = vld [vmem:[#allocation8 + $0x48] sm:$0xff]
    %v114 = vld [vmem:[#allocation8 + $0x50] sm:$0xff]
    %v115 = vld [vmem:[#allocation8 + $0x58] sm:$0xff]
    %v116 = vld [vmem:[#allocation8 + $0x60] sm:$0xff]
    %v117 = vld [vmem:[#allocation8 + $0x68] sm:$0xff]
    %v118 = vld [vmem:[#allocation8 + $0x70] sm:$0xff]
    %v119 = vld [vmem:[#allocation8 + $0x78] sm:$0xff]
    %v120 = vld [vmem:[#allocation8 + $0x80] sm:$0xff]
    %v121 = vld [vmem:[#allocation8 + $0x88] sm:$0xff]
    %v122 = vld [vmem:[#allocation8 + $0x90] sm:$0xff]
    %v123 = vld [vmem:[#allocation8 + $0x98] sm:$0xff]
    %v124 = vld [vmem:[#allocation8 + $0xa0] sm:$0xff]
    %v125 = vld [vmem:[#allocation8 + $0xa8] sm:$0xff]
    %v126 = vld [vmem:[#allocation8 + $0xb0] sm:$0xff]
    %v127 = vld [vmem:[#allocation8 + $0xb8] sm:$0xff]
    %v128 = vld [vmem:[#allocation8 + $0xc0] sm:$0xff]
    %v129 = vld [vmem:[#allocation8 + $0xc8] sm:$0xff]
    %v130 = vld [vmem:[#allocation8 + $0xd0] sm:$0xff]
    %v131 = vld [vmem:[#allocation8 + $0xd8] sm:$0xff]
    %v132 = vld [vmem:[#allocation8 + $0xe0] sm:$0xff]
    %v133 = vld [vmem:[#allocation8 + $0xe8] sm:$0xff]
    %v134 = vld [vmem:[#allocation8 + $0xf0] sm:$0xff]
    %v135 = vld [vmem:[#allocation8 + $0xf8] sm:$0xff]
    %v136 = vld [vmem:[#allocation8 + $0x100] sm:$0xff]
    %v137 = vld [vmem:[#allocation8 + $0x108] sm:$0xff]
    %v138 = vld [vmem:[#allocation8 + $0x110] sm:$0xff]
    %v139 = vld [vmem:[#allocation8 + $0x118] sm:$0xff]
    %v140 = vld [vmem:[#allocation8 + $0x120] sm:$0xff]
    %v141 = vld [vmem:[#allocation8 + $0x128] sm:$0xff]
    %v142 = vld [vmem:[#allocation8 + $0x130] sm:$0xff]
    %v143 = vld [vmem:[#allocation8 + $0x138] sm:$0xff]
    %v144 = vld [vmem:[#allocation8 + $0x140] sm:$0xff]
    %v145 = vld [vmem:[#allocation8 + $0x148] sm:$0xff]
    %v146 = vld [vmem:[#allocation8 + $0x150] sm:$0xff]
    %v147 = vld [vmem:[#allocation8 + $0x158] sm:$0xff]
    %v148 = vld [vmem:[#allocation8 + $0x160] sm:$0xff]
    %v149 = vld [vmem:[#allocation8 + $0x168] sm:$0xff]
    %v150 = vld [vmem:[#allocation8 + $0x170] sm:$0xff]
    %v151 = vld [vmem:[#allocation8 + $0x178] sm:$0xff]
    %v152 = vld [vmem:[#allocation8 + $0x180] sm:$0xff]
    %v153 = vld [vmem:[#allocation8 + $0x188] sm:$0xff]
    %v154 = vld [vmem:[#allocation8 + $0x190] sm:$0xff]
    %v155 = vld [vmem:[#allocation8 + $0x198] sm:$0xff]
    %v156 = vld [vmem:[#allocation8 + $0x1a0] sm:$0xff]
    %v157 = vld [vmem:[#allocation8 + $0x1a8] sm:$0xff]
    %v158 = vld [vmem:[#allocation8 + $0x1b0] sm:$0xff]
    %v159 = vld [vmem:[#allocation8 + $0x1b8] sm:$0xff]
    %v160 = vld [vmem:[#allocation8 + $0x1c0] sm:$0xff]
    %v161 = vld [vmem:[#allocation8 + $0x1c8] sm:$0xff]
    %v162 = vld [vmem:[#allocation8 + $0x1d0] sm:$0xff]
    %v163 = vld [vmem:[#allocation8 + $0x1d8] sm:$0xff]
    %v164 = vld [vmem:[#allocation8 + $0x1e0] sm:$0xff]
    %v165 = vld [vmem:[#allocation8 + $0x1e8] sm:$0xff]
    %v166 = vld [vmem:[#allocation8 + $0x1f0] sm:$0xff]
    %v167 = vld [vmem:[#allocation8 + $0x1f8] sm:$0xff]
    %v168 = vld [vmem:[#allocation8 + $0x200] sm:$0xff]
    %v169 = vld [vmem:[#allocation8 + $0x208] sm:$0xff]
    %v170 = vld [vmem:[#allocation8 + $0x210] sm:$0xff]
    %v171 = vld [vmem:[#allocation8 + $0x218] sm:$0xff]
    %v172 = vld [vmem:[#allocation8 + $0x220] sm:$0xff]
    %v173 = vld [vmem:[#allocation8 + $0x228] sm:$0xff]
    %v174 = vld [vmem:[#allocation8 + $0x230] sm:$0xff]
    %v175 = vld [vmem:[#allocation8 + $0x238] sm:$0xff]
    %v176 = vld [vmem:[#allocation8 + $0x240] sm:$0xff]
    %v177 = vld [vmem:[#allocation8 + $0x248] sm:$0xff]
    %v178 = vld [vmem:[#allocation8 + $0x250] sm:$0xff]
    %v179 = vld [vmem:[#allocation8 + $0x258] sm:$0xff]
    %v180 = vld [vmem:[#allocation8 + $0x260] sm:$0xff]
    %v181 = vld [vmem:[#allocation8 + $0x268] sm:$0xff]
    %v182 = vld [vmem:[#allocation8 + $0x270] sm:$0xff]
    %v183 = vld [vmem:[#allocation8 + $0x278] sm:$0xff]
    %v184 = vld [vmem:[#allocation8 + $0x280] sm:$0xff]
    %v185 = vld [vmem:[#allocation8 + $0x288] sm:$0xff]
    %v186 = vld [vmem:[#allocation8 + $0x290] sm:$0xff]
    %v187 = vld [vmem:[#allocation8 + $0x298] sm:$0xff]
    %v188 = vld [vmem:[#allocation8 + $0x2a0] sm:$0xff]
    %v189 = vld [vmem:[#allocation8 + $0x2a8] sm:$0xff]
    %v190 = vld [vmem:[#allocation8 + $0x2b0] sm:$0xff]
    %v191 = vld [vmem:[#allocation8 + $0x2b8] sm:$0xff]
    %v192 = vld [vmem:[#allocation8 + $0x2c0] sm:$0xff]
    %v193 = vld [vmem:[#allocation8 + $0x2c8] sm:$0xff]
    %v194 = vld [vmem:[#allocation8 + $0x2d0] sm:$0xff]
    %v195 = vld [vmem:[#allocation8 + $0x2d8] sm:$0xff]
    %v196 = vld [vmem:[#allocation8 + $0x2e0] sm:$0xff]
    %v197 = vld [vmem:[#allocation8 + $0x2e8] sm:$0xff]
    %v198 = vld [vmem:[#allocation8 + $0x2f0] sm:$0xff]
    %v199 = vld [vmem:[#allocation8 + $0x2f8] sm:$0xff]
    %v200 = vld [vmem:[#allocation8 + $0x300] sm:$0xff]
    %v201 = vld [vmem:[#allocation8 + $0x308] sm:$0xff]
    %v202 = vld [vmem:[#allocation8 + $0x310] sm:$0xff]
    %v203 = vld [vmem:[#allocation8 + $0x318] sm:$0xff]
    %v204 = vld [vmem:[#allocation8 + $0x320] sm:$0xff]
    %v205 = vld [vmem:[#allocation8 + $0x328] sm:$0xff]
    %v206 = vld [vmem:[#allocation8 + $0x330] sm:$0xff]
    %v207 = vld [vmem:[#allocation8 + $0x338] sm:$0xff]
    %v208 = vld [vmem:[#allocation8 + $0x340] sm:$0xff]
    %v209 = vld [vmem:[#allocation8 + $0x348] sm:$0xff]
    %v210 = vld [vmem:[#allocation8 + $0x350] sm:$0xff]
    %v211 = vld [vmem:[#allocation8 + $0x358] sm:$0xff]
    %v212 = vld [vmem:[#allocation8 + $0x360] sm:$0xff]
    %v213 = vld [vmem:[#allocation8 + $0x368] sm:$0xff]
    %v214 = vld [vmem:[#allocation8 + $0x370] sm:$0xff]
    %v215 = vld [vmem:[#allocation8 + $0x378] sm:$0xff]
    %v216 = vld [vmem:[#allocation8 + $0x380] sm:$0xff]
    %v217 = vld [vmem:[#allocation8 + $0x388] sm:$0xff]
    %v218 = vld [vmem:[#allocation8 + $0x390] sm:$0xff]
    %v219 = vld [vmem:[#allocation8 + $0x398] sm:$0xff]
    %v220 = vld [vmem:[#allocation8 + $0x3a0] sm:$0xff]
    %v221 = vld [vmem:[#allocation8 + $0x3a8] sm:$0xff]
    %v222 = vld [vmem:[#allocation8 + $0x3b0] sm:$0xff]
    %v223 = vld [vmem:[#allocation8 + $0x3b8] sm:$0xff]
    %v224 = vld [vmem:[#allocation8 + $0x3c0] sm:$0xff]
    %v225 = vld [vmem:[#allocation8 + $0x3c8] sm:$0xff]
    %v226 = vld [vmem:[#allocation8 + $0x3d0] sm:$0xff]
    %v227 = vld [vmem:[#allocation8 + $0x3d8] sm:$0xff]
    %v228 = vld [vmem:[#allocation8 + $0x3e0] sm:$0xff]
    %v229 = vld [vmem:[#allocation8 + $0x3e8] sm:$0xff]
    %v230 = vld [vmem:[#allocation8 + $0x3f0] sm:$0xff]
    %v231 = vld [vmem:[#allocation8 + $0x3f8] sm:$0xff]
    %v234 = vunpack.c.l.b16 %v102
    %v235 = vunpack.c.h.b16 %v102
    %v236 = vunpack.c.l.b16 %v103
    %v237 = vunpack.c.h.b16 %v103
    %v238 = vpack.c.b16 %v234, %v234
    %v239 = vpack.c.b16 %v235, %v235
    %v240 = vpack.c.b16 %v236, %v236
    %v241 = vpack.c.b16 %v237, %v237
    %v374 = vunpack.c.l.b16 %v104
    %v375 = vunpack.c.h.b16 %v104
    %v376 = vunpack.c.l.b16 %v105
    %v377 = vunpack.c.h.b16 %v105
    %v378 = vunpack.c.l.b16 %v106
    %v379 = vunpack.c.h.b16 %v106
    %v380 = vunpack.c.l.b16 %v107
    %v381 = vunpack.c.h.b16 %v107
    %v382 = vunpack.c.l.b16 %v108
    %v383 = vunpack.c.h.b16 %v108
    %v384 = vunpack.c.l.b16 %v109
    %v385 = vunpack.c.h.b16 %v109
    %v386 = vunpack.c.l.b16 %v110
    %v387 = vunpack.c.h.b16 %v110
    %v388 = vunpack.c.l.b16 %v111
    %v389 = vunpack.c.h.b16 %v111
    %v390 = vunpack.c.l.b16 %v112
    %v391 = vunpack.c.h.b16 %v112
    %v392 = vunpack.c.l.b16 %v113
    %v393 = vunpack.c.h.b16 %v113
    %v394 = vunpack.c.l.b16 %v114
    %v395 = vunpack.c.h.b16 %v114
    %v396 = vunpack.c.l.b16 %v115
    %v397 = vunpack.c.h.b16 %v115
    %v398 = vunpack.c.l.b16 %v116
    %v399 = vunpack.c.h.b16 %v116
    %v400 = vunpack.c.l.b16 %v117
    %v401 = vunpack.c.h.b16 %v117
    %v402 = vunpack.c.l.b16 %v118
    %v403 = vunpack.c.h.b16 %v118
    %v404 = vunpack.c.l.b16 %v119
    %v405 = vunpack.c.h.b16 %v119
    %v406 = vunpack.c.l.b16 %v120
    %v407 = vunpack.c.h.b16 %v120
    %v408 = vunpack.c.l.b16 %v121
    %v409 = vunpack.c.h.b16 %v121
    %v410 = vunpack.c.l.b16 %v122
    %v411 = vunpack.c.h.b16 %v122
    %v412 = vunpack.c.l.b16 %v123
    %v413 = vunpack.c.h.b16 %v123
    %v414 = vunpack.c.l.b16 %v124
    %v415 = vunpack.c.h.b16 %v124
    %v416 = vunpack.c.l.b16 %v125
    %v417 = vunpack.c.h.b16 %v125
    %v418 = vunpack.c.l.b16 %v126
    %v419 = vunpack.c.h.b16 %v126
    %v420 = vunpack.c.l.b16 %v127
    %v421 = vunpack.c.h.b16 %v127
    %v422 = vunpack.c.l.b16 %v128
    %v423 = vunpack.c.h.b16 %v128
    %v424 = vunpack.c.l.b16 %v129
    %v425 = vunpack.c.h.b16 %v129
    %v426 = vunpack.c.l.b16 %v130
    %v427 = vunpack.c.h.b16 %v130
    %v428 = vunpack.c.l.b16 %v131
    %v429 = vunpack.c.h.b16 %v131
    %v430 = vunpack.c.l.b16 %v132
    %v431 = vunpack.c.h.b16 %v132
    %v432 = vunpack.c.l.b16 %v133
    %v433 = vunpack.c.h.b16 %v133
    %v434 = vunpack.c.l.b16 %v134
    %v435 = vunpack.c.h.b16 %v134
    %v436 = vunpack.c.l.b16 %v135
    %v437 = vunpack.c.h.b16 %v135
    %v438 = vunpack.c.l.b16 %v136
    %v439 = vunpack.c.h.b16 %v136
    %v440 = vunpack.c.l.b16 %v137
    %v441 = vunpack.c.h.b16 %v137
    %v442 = vunpack.c.l.b16 %v138
    %v443 = vunpack.c.h.b16 %v138
    %v444 = vunpack.c.l.b16 %v139
    %v445 = vunpack.c.h.b16 %v139
    %v446 = vunpack.c.l.b16 %v140
    %v447 = vunpack.c.h.b16 %v140
    %v448 = vunpack.c.l.b16 %v141
    %v449 = vunpack.c.h.b16 %v141
    %v450 = vunpack.c.l.b16 %v142
    %v451 = vunpack.c.h.b16 %v142
    %v452 = vunpack.c.l.b16 %v143
    %v453 = vunpack.c.h.b16 %v143
    %v454 = vunpack.c.l.b16 %v144
    %v455 = vunpack.c.h.b16 %v144
    %v456 = vunpack.c.l.b16 %v145
    %v457 = vunpack.c.h.b16 %v145
    %v458 = vunpack.c.l.b16 %v146
    %v459 = vunpack.c.h.b16 %v146
    %v460 = vunpack.c.l.b16 %v147
    %v461 = vunpack.c.h.b16 %v147
    %v462 = vunpack.c.l.b16 %v148
    %v463 = vunpack.c.h.b16 %v148
    %v464 = vunpack.c.l.b16 %v149
    %v465 = vunpack.c.h.b16 %v149
    %v466 = vunpack.c.l.b16 %v150
    %v467 = vunpack.c.h.b16 %v150
    %v468 = vunpack.c.l.b16 %v151
    %v469 = vunpack.c.h.b16 %v151
    %v470 = vunpack.c.l.b16 %v152
    %v471 = vunpack.c.h.b16 %v152
    %v472 = vunpack.c.l.b16 %v153
    %v473 = vunpack.c.h.b16 %v153
    %v474 = vunpack.c.l.b16 %v154
    %v475 = vunpack.c.h.b16 %v154
    %v476 = vunpack.c.l.b16 %v155
    %v477 = vunpack.c.h.b16 %v155
    %v478 = vunpack.c.l.b16 %v156
    %v479 = vunpack.c.h.b16 %v156
    %v480 = vunpack.c.l.b16 %v157
    %v481 = vunpack.c.h.b16 %v157
    %v482 = vunpack.c.l.b16 %v158
    %v483 = vunpack.c.h.b16 %v158
    %v484 = vunpack.c.l.b16 %v159
    %v485 = vunpack.c.h.b16 %v159
    %v486 = vunpack.c.l.b16 %v160
    %v487 = vunpack.c.h.b16 %v160
    %v488 = vunpack.c.l.b16 %v161
    %v489 = vunpack.c.h.b16 %v161
    %v490 = vunpack.c.l.b16 %v162
    %v491 = vunpack.c.h.b16 %v162
    %v492 = vunpack.c.l.b16 %v163
    %v493 = vunpack.c.h.b16 %v163
    %v494 = vunpack.c.l.b16 %v164
    %v495 = vunpack.c.h.b16 %v164
    %v496 = vunpack.c.l.b16 %v165
    %v497 = vunpack.c.h.b16 %v165
    %v498 = vunpack.c.l.b16 %v166
    %v499 = vunpack.c.h.b16 %v166
    %v500 = vunpack.c.l.b16 %v167
    %v501 = vunpack.c.h.b16 %v167
    %v502 = vunpack.c.l.b16 %v168
    %v503 = vunpack.c.h.b16 %v168
    %v504 = vunpack.c.l.b16 %v169
    %v505 = vunpack.c.h.b16 %v169
    %v506 = vunpack.c.l.b16 %v170
    %v507 = vunpack.c.h.b16 %v170
    %v508 = vunpack.c.l.b16 %v171
    %v509 = vunpack.c.h.b16 %v171
    %v510 = vunpack.c.l.b16 %v172
    %v511 = vunpack.c.h.b16 %v172
    %v512 = vunpack.c.l.b16 %v173
    %v513 = vunpack.c.h.b16 %v173
    %v514 = vunpack.c.l.b16 %v174
    %v515 = vunpack.c.h.b16 %v174
    %v516 = vunpack.c.l.b16 %v175
    %v517 = vunpack.c.h.b16 %v175
    %v518 = vunpack.c.l.b16 %v176
    %v519 = vunpack.c.h.b16 %v176
    %v520 = vunpack.c.l.b16 %v177
    %v521 = vunpack.c.h.b16 %v177
    %v522 = vunpack.c.l.b16 %v178
    %v523 = vunpack.c.h.b16 %v178
    %v524 = vunpack.c.l.b16 %v179
    %v525 = vunpack.c.h.b16 %v179
    %v526 = vunpack.c.l.b16 %v180
    %v527 = vunpack.c.h.b16 %v180
    %v528 = vunpack.c.l.b16 %v181
    %v529 = vunpack.c.h.b16 %v181
    %v530 = vunpack.c.l.b16 %v182
    %v531 = vunpack.c.h.b16 %v182
    %v532 = vunpack.c.l.b16 %v183
    %v533 = vunpack.c.h.b16 %v183
    %v534 = vunpack.c.l.b16 %v184
    %v535 = vunpack.c.h.b16 %v184
    %v536 = vunpack.c.l.b16 %v185
    %v537 = vunpack.c.h.b16 %v185
    %v538 = vunpack.c.l.b16 %v186
    %v539 = vunpack.c.h.b16 %v186
    %v540 = vunpack.c.l.b16 %v187
    %v541 = vunpack.c.h.b16 %v187
    %v542 = vunpack.c.l.b16 %v188
    %v543 = vunpack.c.h.b16 %v188
    %v544 = vunpack.c.l.b16 %v189
    %v545 = vunpack.c.h.b16 %v189
    %v546 = vunpack.c.l.b16 %v190
    %v547 = vunpack.c.h.b16 %v190
    %v548 = vunpack.c.l.b16 %v191
    %v549 = vunpack.c.h.b16 %v191
    %v550 = vunpack.c.l.b16 %v192
    %v551 = vunpack.c.h.b16 %v192
    %v552 = vunpack.c.l.b16 %v193
    %v553 = vunpack.c.h.b16 %v193
    %v554 = vunpack.c.l.b16 %v194
    %v555 = vunpack.c.h.b16 %v194
    %v556 = vunpack.c.l.b16 %v195
    %v557 = vunpack.c.h.b16 %v195
    %v558 = vunpack.c.l.b16 %v196
    %v559 = vunpack.c.h.b16 %v196
    %v560 = vunpack.c.l.b16 %v197
    %v561 = vunpack.c.h.b16 %v197
    %v562 = vunpack.c.l.b16 %v198
    %v563 = vunpack.c.h.b16 %v198
    %v564 = vunpack.c.l.b16 %v199
    %v565 = vunpack.c.h.b16 %v199
    %v566 = vunpack.c.l.b16 %v200
    %v567 = vunpack.c.h.b16 %v200
    %v568 = vunpack.c.l.b16 %v201
    %v569 = vunpack.c.h.b16 %v201
    %v570 = vunpack.c.l.b16 %v202
    %v571 = vunpack.c.h.b16 %v202
    %v572 = vunpack.c.l.b16 %v203
    %v573 = vunpack.c.h.b16 %v203
    %v574 = vunpack.c.l.b16 %v204
    %v575 = vunpack.c.h.b16 %v204
    %v576 = vunpack.c.l.b16 %v205
    %v577 = vunpack.c.h.b16 %v205
    %v578 = vunpack.c.l.b16 %v206
    %v579 = vunpack.c.h.b16 %v206
    %v580 = vunpack.c.l.b16 %v207
    %v581 = vunpack.c.h.b16 %v207
    %v582 = vunpack.c.l.b16 %v208
    %v583 = vunpack.c.h.b16 %v208
    %v584 = vunpack.c.l.b16 %v209
    %v585 = vunpack.c.h.b16 %v209
    %v586 = vunpack.c.l.b16 %v210
    %v587 = vunpack.c.h.b16 %v210
    %v588 = vunpack.c.l.b16 %v211
    %v589 = vunpack.c.h.b16 %v211
    %v590 = vunpack.c.l.b16 %v212
    %v591 = vunpack.c.h.b16 %v212
    %v592 = vunpack.c.l.b16 %v213
    %v593 = vunpack.c.h.b16 %v213
    %v594 = vunpack.c.l.b16 %v214
    %v595 = vunpack.c.h.b16 %v214
    %v596 = vunpack.c.l.b16 %v215
    %v597 = vunpack.c.h.b16 %v215
    %v598 = vunpack.c.l.b16 %v216
    %v599 = vunpack.c.h.b16 %v216
    %v600 = vunpack.c.l.b16 %v217
    %v601 = vunpack.c.h.b16 %v217
    %v602 = vunpack.c.l.b16 %v218
    %v603 = vunpack.c.h.b16 %v218
    %v604 = vunpack.c.l.b16 %v219
    %v605 = vunpack.c.h.b16 %v219
    %v606 = vunpack.c.l.b16 %v220
    %v607 = vunpack.c.h.b16 %v220
    %v608 = vunpack.c.l.b16 %v221
    %v609 = vunpack.c.h.b16 %v221
    %v610 = vunpack.c.l.b16 %v222
    %v611 = vunpack.c.h.b16 %v222
    %v612 = vunpack.c.l.b16 %v223
    %v613 = vunpack.c.h.b16 %v223
    %v614 = vunpack.c.l.b16 %v224
    %v615 = vunpack.c.h.b16 %v224
    %v616 = vunpack.c.l.b16 %v225
    %v617 = vunpack.c.h.b16 %v225
    %v618 = vunpack.c.l.b16 %v226
    %v619 = vunpack.c.h.b16 %v226
    %v620 = vunpack.c.l.b16 %v227
    %v621 = vunpack.c.h.b16 %v227
    %v622 = vunpack.c.l.b16 %v228
    %v623 = vunpack.c.h.b16 %v228
    %v624 = vunpack.c.l.b16 %v229
    %v625 = vunpack.c.h.b16 %v229
    %v626 = vunpack.c.l.b16 %v230
    %v627 = vunpack.c.h.b16 %v230
    %v628 = vunpack.c.l.b16 %v231
    %v629 = vunpack.c.h.b16 %v231
    %v630 = vpack.c.b16 %v378, %v374
    %v631 = vpack.c.b16 %v379, %v375
    %v632 = vpack.c.b16 %v380, %v376
    %v633 = vpack.c.b16 %v381, %v377
    %v634 = vpack.c.b16 %v386, %v382
    %v635 = vpack.c.b16 %v387, %v383
    %v636 = vpack.c.b16 %v388, %v384
    %v637 = vpack.c.b16 %v389, %v385
    %v638 = vpack.c.b16 %v394, %v390
    %v639 = vpack.c.b16 %v395, %v391
    %v640 = vpack.c.b16 %v396, %v392
    %v641 = vpack.c.b16 %v397, %v393
    %v642 = vpack.c.b16 %v402, %v398
    %v643 = vpack.c.b16 %v403, %v399
    %v644 = vpack.c.b16 %v404, %v400
    %v645 = vpack.c.b16 %v405, %v401
    %v646 = vpack.c.b16 %v410, %v406
    %v647 = vpack.c.b16 %v411, %v407
    %v648 = vpack.c.b16 %v412, %v408
    %v649 = vpack.c.b16 %v413, %v409
    %v650 = vpack.c.b16 %v418, %v414
    %v651 = vpack.c.b16 %v419, %v415
    %v652 = vpack.c.b16 %v420, %v416
    %v653 = vpack.c.b16 %v421, %v417
    %v654 = vpack.c.b16 %v426, %v422
    %v655 = vpack.c.b16 %v427, %v423
    %v656 = vpack.c.b16 %v428, %v424
    %v657 = vpack.c.b16 %v429, %v425
    %v658 = vpack.c.b16 %v434, %v430
    %v659 = vpack.c.b16 %v435, %v431
    %v660 = vpack.c.b16 %v436, %v432
    %v661 = vpack.c.b16 %v437, %v433
    %v662 = vpack.c.b16 %v442, %v438
    %v663 = vpack.c.b16 %v443, %v439
    %v664 = vpack.c.b16 %v444, %v440
    %v665 = vpack.c.b16 %v445, %v441
    %v666 = vpack.c.b16 %v450, %v446
    %v667 = vpack.c.b16 %v451, %v447
    %v668 = vpack.c.b16 %v452, %v448
    %v669 = vpack.c.b16 %v453, %v449
    %v670 = vpack.c.b16 %v458, %v454
    %v671 = vpack.c.b16 %v459, %v455
    %v672 = vpack.c.b16 %v460, %v456
    %v673 = vpack.c.b16 %v461, %v457
    %v674 = vpack.c.b16 %v466, %v462
    %v675 = vpack.c.b16 %v467, %v463
    %v676 = vpack.c.b16 %v468, %v464
    %v677 = vpack.c.b16 %v469, %v465
    %v678 = vpack.c.b16 %v474, %v470
    %v679 = vpack.c.b16 %v475, %v471
    %v680 = vpack.c.b16 %v476, %v472
    %v681 = vpack.c.b16 %v477, %v473
    %v682 = vpack.c.b16 %v482, %v478
    %v683 = vpack.c.b16 %v483, %v479
    %v684 = vpack.c.b16 %v484, %v480
    %v685 = vpack.c.b16 %v485, %v481
    %v686 = vpack.c.b16 %v490, %v486
    %v687 = vpack.c.b16 %v491, %v487
    %v688 = vpack.c.b16 %v492, %v488
    %v689 = vpack.c.b16 %v493, %v489
    %v690 = vpack.c.b16 %v498, %v494
    %v691 = vpack.c.b16 %v499, %v495
    %v692 = vpack.c.b16 %v500, %v496
    %v693 = vpack.c.b16 %v501, %v497
    %v694 = vpack.c.b16 %v506, %v502
    %v695 = vpack.c.b16 %v507, %v503
    %v696 = vpack.c.b16 %v508, %v504
    %v697 = vpack.c.b16 %v509, %v505
    %v698 = vpack.c.b16 %v514, %v510
    %v699 = vpack.c.b16 %v515, %v511
    %v700 = vpack.c.b16 %v516, %v512
    %v701 = vpack.c.b16 %v517, %v513
    %v702 = vpack.c.b16 %v522, %v518
    %v703 = vpack.c.b16 %v523, %v519
    %v704 = vpack.c.b16 %v524, %v520
    %v705 = vpack.c.b16 %v525, %v521
    %v706 = vpack.c.b16 %v530, %v526
    %v707 = vpack.c.b16 %v531, %v527
    %v708 = vpack.c.b16 %v532, %v528
    %v709 = vpack.c.b16 %v533, %v529
    %v710 = vpack.c.b16 %v538, %v534
    %v711 = vpack.c.b16 %v539, %v535
    %v712 = vpack.c.b16 %v540, %v536
    %v713 = vpack.c.b16 %v541, %v537
    %v714 = vpack.c.b16 %v546, %v542
    %v715 = vpack.c.b16 %v547, %v543
    %v716 = vpack.c.b16 %v548, %v544
    %v717 = vpack.c.b16 %v549, %v545
    %v718 = vpack.c.b16 %v554, %v550
    %v719 = vpack.c.b16 %v555, %v551
    %v720 = vpack.c.b16 %v556, %v552
    %v721 = vpack.c.b16 %v557, %v553
    %v722 = vpack.c.b16 %v562, %v558
    %v723 = vpack.c.b16 %v563, %v559
    %v724 = vpack.c.b16 %v564, %v560
    %v725 = vpack.c.b16 %v565, %v561
    %v726 = vpack.c.b16 %v570, %v566
    %v727 = vpack.c.b16 %v571, %v567
    %v728 = vpack.c.b16 %v572, %v568
    %v729 = vpack.c.b16 %v573, %v569
    %v730 = vpack.c.b16 %v578, %v574
    %v731 = vpack.c.b16 %v579, %v575
    %v732 = vpack.c.b16 %v580, %v576
    %v733 = vpack.c.b16 %v581, %v577
    %v734 = vpack.c.b16 %v586, %v582
    %v735 = vpack.c.b16 %v587, %v583
    %v736 = vpack.c.b16 %v588, %v584
    %v737 = vpack.c.b16 %v589, %v585
    %v738 = vpack.c.b16 %v594, %v590
    %v739 = vpack.c.b16 %v595, %v591
    %v740 = vpack.c.b16 %v596, %v592
    %v741 = vpack.c.b16 %v597, %v593
    %v742 = vpack.c.b16 %v602, %v598
    %v743 = vpack.c.b16 %v603, %v599
    %v744 = vpack.c.b16 %v604, %v600
    %v745 = vpack.c.b16 %v605, %v601
    %v746 = vpack.c.b16 %v610, %v606
    %v747 = vpack.c.b16 %v611, %v607
    %v748 = vpack.c.b16 %v612, %v608
    %v749 = vpack.c.b16 %v613, %v609
    %v750 = vpack.c.b16 %v618, %v614
    %v751 = vpack.c.b16 %v619, %v615
    %v752 = vpack.c.b16 %v620, %v616
    %v753 = vpack.c.b16 %v621, %v617
    %v754 = vpack.c.b16 %v626, %v622
    %v755 = vpack.c.b16 %v627, %v623
    %v756 = vpack.c.b16 %v628, %v624
    %v757 = vpack.c.b16 %v629, %v625
    %886 = vmatprep.subr.bf16.mxu0 %v631
    %887 = vmatpush1.bf16.msra.mxu0 %v630
    %888 = vmatprep.subr.bf16.mxu0 %v635
    %889 = vmatpush1.bf16.msra.mxu0 %v634
    %890 = vmatprep.subr.bf16.mxu0 %v639
    %891 = vmatpush1.bf16.msra.mxu0 %v638
    %892 = vmatprep.subr.bf16.mxu0 %v643
    %893 = vmatpush1.bf16.msra.mxu0 %v642
    %894 = vmatprep.subr.bf16.mxu0 %v647
    %895 = vmatpush1.bf16.msra.mxu0 %v646
    %896 = vmatprep.subr.bf16.mxu0 %v651
    %897 = vmatpush1.bf16.msra.mxu0 %v650
    %898 = vmatprep.subr.bf16.mxu0 %v655
    %899 = vmatpush1.bf16.msra.mxu0 %v654
    %900 = vmatprep.subr.bf16.mxu0 %v659
    %901 = vmatpush1.bf16.msra.mxu0 %v658
    %902 = vmatprep.subr.bf16.mxu0 %v663
    %903 = vmatpush1.bf16.msra.mxu0 %v662
    %904 = vmatprep.subr.bf16.mxu0 %v667
    %905 = vmatpush1.bf16.msra.mxu0 %v666
    %906 = vmatprep.subr.bf16.mxu0 %v671
    %907 = vmatpush1.bf16.msra.mxu0 %v670
    %908 = vmatprep.subr.bf16.mxu0 %v675
    %909 = vmatpush1.bf16.msra.mxu0 %v674
    %910 = vmatprep.subr.bf16.mxu0 %v679
    %911 = vmatpush1.bf16.msra.mxu0 %v678
    %912 = vmatprep.subr.bf16.mxu0 %v683
    %913 = vmatpush1.bf16.msra.mxu0 %v682
    %914 = vmatprep.subr.bf16.mxu0 %v687
    %915 = vmatpush1.bf16.msra.mxu0 %v686
    %916 = vmatprep.subr.bf16.mxu0 %v691
    %917 = vmatpush1.bf16.msra.mxu0 %v690
    %918 = vmatprep.mubr.bf16.mxu0 %v239
    %919 = vmatmul.mubr.bf16.gmra.mrb[0].mxu0 %v238
    %v920 = vpop.f32.mrb[0].mxu0
    %v921 = vadd.f32 0.0, %v920
    %v922 = vpop.f32.mrb[0].mxu0
    %v923 = vadd.f32 0.0, %v922
    %v924 = vpop.f32.mrb[0].mxu0
    %v925 = vpop.f32.mrb[0].mxu0
    %926 = vdwg.mxu0
    %927 = vmatprep.subr.bf16.mxu0 %v695
    %928 = vmatpush1.bf16.msra.mxu0 %v694
    %929 = vmatprep.subr.bf16.mxu0 %v699
    %930 = vmatpush1.bf16.msra.mxu0 %v698
    %931 = vmatprep.subr.bf16.mxu0 %v703
    %932 = vmatpush1.bf16.msra.mxu0 %v702
    %933 = vmatprep.subr.bf16.mxu0 %v707
    %934 = vmatpush1.bf16.msra.mxu0 %v706
    %935 = vmatprep.subr.bf16.mxu0 %v711
    %936 = vmatpush1.bf16.msra.mxu0 %v710
    %937 = vmatprep.subr.bf16.mxu0 %v715
    %938 = vmatpush1.bf16.msra.mxu0 %v714
    %939 = vmatprep.subr.bf16.mxu0 %v719
    %940 = vmatpush1.bf16.msra.mxu0 %v718
    %941 = vmatprep.subr.bf16.mxu0 %v723
    %942 = vmatpush1.bf16.msra.mxu0 %v722
    %943 = vmatprep.subr.bf16.mxu0 %v727
    %944 = vmatpush1.bf16.msra.mxu0 %v726
    %945 = vmatprep.subr.bf16.mxu0 %v731
    %946 = vmatpush1.bf16.msra.mxu0 %v730
    %947 = vmatprep.subr.bf16.mxu0 %v735
    %948 = vmatpush1.bf16.msra.mxu0 %v734
    %949 = vmatprep.subr.bf16.mxu0 %v739
    %950 = vmatpush1.bf16.msra.mxu0 %v738
    %951 = vmatprep.subr.bf16.mxu0 %v743
    %952 = vmatpush1.bf16.msra.mxu0 %v742
    %953 = vmatprep.subr.bf16.mxu0 %v747
    %954 = vmatpush1.bf16.msra.mxu0 %v746
    %955 = vmatprep.subr.bf16.mxu0 %v751
    %956 = vmatpush1.bf16.msra.mxu0 %v750
    %957 = vmatprep.subr.bf16.mxu0 %v755
    %958 = vmatpush1.bf16.msra.mxu0 %v754
    %959 = vmatprep.mubr.bf16.mxu0 %v241
    %960 = vmatmul.mubr.bf16.gmra.mrb[0].mxu0 %v240
    %v961 = vpop.f32.mrb[0].mxu0
    %v962 = vadd.f32 %v921, %v961
    %v963 = vpop.f32.mrb[0].mxu0
    %v964 = vadd.f32 %v923, %v963
    %v965 = vpop.f32.mrb[0].mxu0
    %v966 = vpop.f32.mrb[0].mxu0
    %967 = vdwg.mxu0
    %968 = vmatprep.subr.bf16.mxu0 %v633
    %969 = vmatpush1.bf16.msra.mxu0 %v632
    %970 = vmatprep.subr.bf16.mxu0 %v637
    %971 = vmatpush1.bf16.msra.mxu0 %v636
    %972 = vmatprep.subr.bf16.mxu0 %v641
    %973 = vmatpush1.bf16.msra.mxu0 %v640
    %974 = vmatprep.subr.bf16.mxu0 %v645
    %975 = vmatpush1.bf16.msra.mxu0 %v644
    %976 = vmatprep.subr.bf16.mxu0 %v649
    %977 = vmatpush1.bf16.msra.mxu0 %v648
    %978 = vmatprep.subr.bf16.mxu0 %v653
    %979 = vmatpush1.bf16.msra.mxu0 %v652
    %980 = vmatprep.subr.bf16.mxu0 %v657
    %981 = vmatpush1.bf16.msra.mxu0 %v656
    %982 = vmatprep.subr.bf16.mxu0 %v661
    %983 = vmatpush1.bf16.msra.mxu0 %v660
    %984 = vmatprep.subr.bf16.mxu0 %v665
    %985 = vmatpush1.bf16.msra.mxu0 %v664
    %986 = vmatprep.subr.bf16.mxu0 %v669
    %987 = vmatpush1.bf16.msra.mxu0 %v668
    %988 = vmatprep.subr.bf16.mxu0 %v673
    %989 = vmatpush1.bf16.msra.mxu0 %v672
    %990 = vmatprep.subr.bf16.mxu0 %v677
    %991 = vmatpush1.bf16.msra.mxu0 %v676
    %992 = vmatprep.subr.bf16.mxu0 %v681
    %993 = vmatpush1.bf16.msra.mxu0 %v680
    %994 = vmatprep.subr.bf16.mxu0 %v685
    %995 = vmatpush1.bf16.msra.mxu0 %v684
    %996 = vmatprep.subr.bf16.mxu0 %v689
    %997 = vmatpush1.bf16.msra.mxu0 %v688
    %998 = vmatprep.subr.bf16.mxu0 %v693
    %999 = vmatpush1.bf16.msra.mxu0 %v692
    %1000 = vmatprep.mubr.bf16.mxu0 %v239
    %1001 = vmatmul.mubr.bf16.gmra.mrb[0].mxu0 %v238
    %v1002 = vpop.f32.mrb[0].mxu0
    %v1003 = vadd.f32 0.0, %v1002
    %v1004 = vpop.f32.mrb[0].mxu0
    %v1005 = vadd.f32 0.0, %v1004
    %v1006 = vpop.f32.mrb[0].mxu0
    %v1007 = vpop.f32.mrb[0].mxu0
    %1008 = vdwg.mxu0
    %1009 = vmatprep.subr.bf16.mxu0 %v697
    %1010 = vmatpush1.bf16.msra.mxu0 %v696
    %1011 = vmatprep.subr.bf16.mxu0 %v701
    %1012 = vmatpush1.bf16.msra.mxu0 %v700
    %1013 = vmatprep.subr.bf16.mxu0 %v705
    %1014 = vmatpush1.bf16.msra.mxu0 %v704
    %1015 = vmatprep.subr.bf16.mxu0 %v709
    %1016 = vmatpush1.bf16.msra.mxu0 %v708
    %1017 = vmatprep.subr.bf16.mxu0 %v713
    %1018 = vmatpush1.bf16.msra.mxu0 %v712
    %1019 = vmatprep.subr.bf16.mxu0 %v717
    %1020 = vmatpush1.bf16.msra.mxu0 %v716
    %1021 = vmatprep.subr.bf16.mxu0 %v721
    %1022 = vmatpush1.bf16.msra.mxu0 %v720
    %1023 = vmatprep.subr.bf16.mxu0 %v725
    %1024 = vmatpush1.bf16.msra.mxu0 %v724
    %1025 = vmatprep.subr.bf16.mxu0 %v729
    %1026 = vmatpush1.bf16.msra.mxu0 %v728
    %1027 = vmatprep.subr.bf16.mxu0 %v733
    %1028 = vmatpush1.bf16.msra.mxu0 %v732
    %1029 = vmatprep.subr.bf16.mxu0 %v737
    %1030 = vmatpush1.bf16.msra.mxu0 %v736
    %1031 = vmatprep.subr.bf16.mxu0 %v741
    %1032 = vmatpush1.bf16.msra.mxu0 %v740
    %1033 = vmatprep.subr.bf16.mxu0 %v745
    %1034 = vmatpush1.bf16.msra.mxu0 %v744
    %1035 = vmatprep.subr.bf16.mxu0 %v749
    %1036 = vmatpush1.bf16.msra.mxu0 %v748
    %1037 = vmatprep.subr.bf16.mxu0 %v753
    %1038 = vmatpush1.bf16.msra.mxu0 %v752
    %1039 = vmatprep.subr.bf16.mxu0 %v757
    %1040 = vmatpush1.bf16.msra.mxu0 %v756
    %1041 = vmatprep.mubr.bf16.mxu0 %v241
    %1042 = vmatmul.mubr.bf16.gmra.mrb[0].mxu0 %v240
    %v1043 = vpop.f32.mrb[0].mxu0
    %v1044 = vadd.f32 %v1003, %v1043
    %v1045 = vpop.f32.mrb[0].mxu0
    %v1046 = vadd.f32 %v1005, %v1045
    %v1047 = vpop.f32.mrb[0].mxu0
    %v1048 = vpop.f32.mrb[0].mxu0
    %1049 = vdwg.mxu0
    %v1050 = vadd.f32 %v98, %v962
    %v1051 = vadd.f32 %v99, %v964
    %v1052 = vadd.f32 %v100, %v1044
    %v1053 = vadd.f32 %v101, %v1046
    %1054 = vst [vmem:[#allocation2] sm:$0xff] %v1050
    %1055 = vst [vmem:[#allocation2 + $0x8] sm:$0xff] %v1051
    %1056 = vst [vmem:[#allocation2 + $0x10] sm:$0xff] %v1052
    %1057 = vst [vmem:[#allocation2 + $0x18] sm:$0xff] %v1053
    // Predicated region
    $region58: #{tpu_custom_call.1} parent=1 // pred_check
      %p1058 = pneg %p90
    $region59: #{tpu_custom_call.1} parent=1 // pred_check_branch
      %1060 = sbr.rel (%p1058) target = $region61
    $region60: #{tpu_custom_call.1} parent=1 // pred_region
      %s1061 = sld [smem:[#allocation4]]
      %v1062 = vld [vmem:[#allocation2] sm:$0xff]
      %v1063 = vld [vmem:[#allocation2 + $0x8] sm:$0xff]
      %v1064 = vld [vmem:[#allocation2 + $0x10] sm:$0xff]
      %v1065 = vld [vmem:[#allocation2 + $0x18] sm:$0xff]
      %v1066 = vld [vmem:[%s3] sm:$0x1]
      %v1068 = vlaneseq
      %v1069 = vshrl.u32 %v1068, 7
      %v1070 = vsub.s32 0, %v1069
      %v1071 = vrot.slane %v1066, %v1070
      %v1073 = vadd.f32 %v1062, %v1071
      %vm1074 = vcmp.gt.f32.partialorder %v1073, 0.0
      %v1075 = vmul.f32 %v1073, 0.2
      %v1076 = vsel %vm1074, %v1073, %v1075
      %v1077 = vpack.c.bf16 %v1076, %v1076
      %v1078 = vld [vmem:[#allocation10] sm:$0xf]
      %v1079 = vld [vmem:[#allocation10 + $0x4] sm:$0xf]
      %v1080 = vld [vmem:[#allocation10 + $0x8] sm:$0xf]
      %v1081 = vld [vmem:[#allocation10 + $0xc] sm:$0xf]
      %v1082 = vld [vmem:[#allocation10 + $0x10] sm:$0xf]
      %v1083 = vld [vmem:[#allocation10 + $0x14] sm:$0xf]
      %v1084 = vld [vmem:[#allocation10 + $0x18] sm:$0xf]
      %v1085 = vld [vmem:[#allocation10 + $0x1c] sm:$0xf]
      %v1086 = vld [vmem:[#allocation10 + $0x20] sm:$0xf]
      %v1087 = vld [vmem:[#allocation10 + $0x24] sm:$0xf]
      %v1088 = vld [vmem:[#allocation10 + $0x28] sm:$0xf]
      %v1089 = vld [vmem:[#allocation10 + $0x2c] sm:$0xf]
      %v1090 = vld [vmem:[#allocation10 + $0x30] sm:$0xf]
      %v1091 = vld [vmem:[#allocation10 + $0x34] sm:$0xf]
      %v1092 = vld [vmem:[#allocation10 + $0x38] sm:$0xf]
      %v1093 = vld [vmem:[#allocation10 + $0x3c] sm:$0xf]
      %v1094 = vld [vmem:[%s5] sm:$0x1]
      %v1096 = vlaneseq
      %v1097 = vshrl.u32 %v1096, 7
      %v1098 = vsub.s32 0, %v1097
      %v1099 = vrot.slane %v1094, %v1098
      %v1117 = vunpack.c.l.b16 %v1078
      %v1118 = vunpack.c.l.b16 %v1079
      %v1119 = vunpack.c.l.b16 %v1080
      %v1120 = vunpack.c.l.b16 %v1081
      %v1121 = vunpack.c.l.b16 %v1082
      %v1122 = vunpack.c.l.b16 %v1083
      %v1123 = vunpack.c.l.b16 %v1084
      %v1124 = vunpack.c.l.b16 %v1085
      %v1125 = vunpack.c.l.b16 %v1086
      %v1126 = vunpack.c.l.b16 %v1087
      %v1127 = vunpack.c.l.b16 %v1088
      %v1128 = vunpack.c.l.b16 %v1089
      %v1129 = vunpack.c.l.b16 %v1090
      %v1130 = vunpack.c.l.b16 %v1091
      %v1131 = vunpack.c.l.b16 %v1092
      %v1132 = vunpack.c.l.b16 %v1093
      %v1133 = vpack.c.b16 %v1118, %v1117
      %v1134 = vpack.c.b16 %v1120, %v1119
      %v1135 = vpack.c.b16 %v1122, %v1121
      %v1136 = vpack.c.b16 %v1124, %v1123
      %v1137 = vpack.c.b16 %v1126, %v1125
      %v1138 = vpack.c.b16 %v1128, %v1127
      %v1139 = vpack.c.b16 %v1130, %v1129
      %v1140 = vpack.c.b16 %v1132, %v1131
      %1149 = vmatprep.subr.bf16.mxu0 0
      %1150 = vmatpush1.bf16.msra.mxu0 %v1133
      %1151 = vmatprep.subr.bf16.mxu0 0
      %1152 = vmatpush1.bf16.msra.mxu0 %v1134
      %1153 = vmatprep.subr.bf16.mxu0 0
      %1154 = vmatpush1.bf16.msra.mxu0 %v1135
      %1155 = vmatprep.subr.bf16.mxu0 0
      %1156 = vmatpush1.bf16.msra.mxu0 %v1136
      %1157 = vmatprep.subr.bf16.mxu0 0
      %1158 = vmatpush1.bf16.msra.mxu0 %v1137
      %1159 = vmatprep.subr.bf16.mxu0 0
      %1160 = vmatpush1.bf16.msra.mxu0 %v1138
      %1161 = vmatprep.subr.bf16.mxu0 0
      %1162 = vmatpush1.bf16.msra.mxu0 %v1139
      %1163 = vmatprep.subr.bf16.mxu0 0
      %1164 = vmatpush1.bf16.msra.mxu0 %v1140
      %1165 = vmatprep.subr.bf16.mxu0 0
      %1166 = vmatpush1.bf16.msra.mxu0 0
      %1167 = vmatprep.subr.bf16.mxu0 0
      %1168 = vmatpush1.bf16.msra.mxu0 0
      %1169 = vmatprep.subr.bf16.mxu0 0
      %1170 = vmatpush1.bf16.msra.mxu0 0
      %1171 = vmatprep.subr.bf16.mxu0 0
      %1172 = vmatpush1.bf16.msra.mxu0 0
      %1173 = vmatprep.subr.bf16.mxu0 0
      %1174 = vmatpush1.bf16.msra.mxu0 0
      %1175 = vmatprep.subr.bf16.mxu0 0
      %1176 = vmatpush1.bf16.msra.mxu0 0
      %1177 = vmatprep.subr.bf16.mxu0 0
      %1178 = vmatpush1.bf16.msra.mxu0 0
      %1179 = vmatprep.subr.bf16.mxu0 0
      %1180 = vmatpush1.bf16.msra.mxu0 0
      %1181 = vmatprep.mubr.bf16.mxu0 0
      %1182 = vmatmul.mubr.bf16.gmra.mrb[0].mxu0 %v1077
      %v1183 = vpop.f32.mrb[0].mxu0
      %v1184 = vadd.f32 %v1099, %v1183
      %v1185 = vpop.f32.mrb[0].mxu0
      %v1186 = vpop.f32.mrb[0].mxu0
      %v1187 = vpop.f32.mrb[0].mxu0
      %1188 = vdwg.mxu0
      %vm1189 = vcmp.gt.f32.partialorder %v1184, 0.0
      %v1190 = vmul.f32 %v1184, 0.2
      %v1191 = vsel %vm1189, %v1184, %v1190
      %v1195 = vcombine.low %v1063, %v1064
      %v1196 = vcombine.high %v1063, %v1064
      %v1197 = vcombine.high %v1065, %v1065
      %v1199 = vunpack.c.l.s4 1966171168
      %v1200 = vunpack.c.0.s8 %v1199
      %v1201 = vlaneseq
      %v1202 = vshrl.u32 %v1201, 7
      %v1203 = vsub.s32 %v1200, %v1202
      %v1204 = vrot.slane %v1195, %v1203
      %v1206 = vunpack.c.l.s4 1966171168
      %v1207 = vunpack.c.0.s8 %v1206
      %v1208 = vlaneseq
      %v1209 = vshrl.u32 %v1208, 7
      %v1210 = vsub.s32 %v1207, %v1209
      %v1211 = vrot.slane %v1196, %v1210
      %v1213 = vunpack.c.l.s4 1966171168
      %v1214 = vunpack.c.0.s8 %v1213
      %v1215 = vlaneseq
      %v1216 = vshrl.u32 %v1215, 7
      %v1217 = vsub.s32 %v1214, %v1216
      %v1218 = vrot.slane %v1065, %v1217
      %v1220 = vunpack.c.l.s4 1966171168
      %v1221 = vunpack.c.0.s8 %v1220
      %v1222 = vlaneseq
      %v1223 = vshrl.u32 %v1222, 7
      %v1224 = vsub.s32 %v1221, %v1223
      %v1225 = vrot.slane %v1197, %v1224
      %v1226 = vcombine.low %v1204, %v1218
      %v1227 = vcombine.high %v1204, %v1218
      %v1228 = vcombine.low %v1211, %v1225
      %v1229 = vcombine.high %v1211, %v1225
      %v1231 = vunpack.c.l.s4 1966171168
      %v1232 = vunpack.c.0.s8 %v1231
      %v1233 = vlaneseq
      %v1234 = vshrl.u32 %v1233, 7
      %v1235 = vsub.s32 %v1232, %v1234
      %v1236 = vrot.slane %v1226, %v1235
      %v1238 = vunpack.c.l.s4 1966171168
      %v1239 = vunpack.c.0.s8 %v1238
      %v1240 = vlaneseq
      %v1241 = vshrl.u32 %v1240, 7
      %v1242 = vsub.s32 %v1239, %v1241
      %v1243 = vrot.slane %v1228, %v1242
      %v1245 = vunpack.c.l.s4 1966171168
      %v1246 = vunpack.c.0.s8 %v1245
      %v1247 = vlaneseq
      %v1248 = vshrl.u32 %v1247, 7
      %v1249 = vsub.s32 %v1246, %v1248
      %v1250 = vrot.slane %v1227, %v1249
      %v1252 = vunpack.c.l.s4 1966171168
      %v1253 = vunpack.c.0.s8 %v1252
      %v1254 = vlaneseq
      %v1255 = vshrl.u32 %v1254, 7
      %v1256 = vsub.s32 %v1253, %v1255
      %v1257 = vrot.slane %v1229, %v1256
      %v1258 = vcombine.high %v1236, %v1236
      %v1259 = vcombine.high %v1243, %v1243
      %v1260 = vcombine.high %v1250, %v1250
      %v1261 = vcombine.high %v1257, %v1257
      %v1262 = vlaneseq
      %v1263 = vshrl.u32 %v1262, 7
      %v1264 = vsub.s32 0, %v1263
      %v1265 = vrot.slane %v1236, %v1264
      %v1266 = vlaneseq
      %v1267 = vshrl.u32 %v1266, 7
      %v1268 = vsub.s32 1, %v1267
      %v1269 = vrot.slane %v1236, %v1268
      %v1270 = vlaneseq
      %v1271 = vshrl.u32 %v1270, 7
      %v1272 = vsub.s32 2, %v1271
      %v1273 = vrot.slane %v1236, %v1272
      %v1274 = vlaneseq
      %v1275 = vshrl.u32 %v1274, 7
      %v1276 = vsub.s32 0, %v1275
      %v1277 = vrot.slane %v1250, %v1276
      %v1278 = vlaneseq
      %v1279 = vshrl.u32 %v1278, 7
      %v1280 = vsub.s32 1, %v1279
      %v1281 = vrot.slane %v1250, %v1280
      %v1282 = vlaneseq
      %v1283 = vshrl.u32 %v1282, 7
      %v1284 = vsub.s32 2, %v1283
      %v1285 = vrot.slane %v1250, %v1284
      %v1286 = vlaneseq
      %v1287 = vshrl.u32 %v1286, 7
      %v1288 = vsub.s32 0, %v1287
      %v1289 = vrot.slane %v1258, %v1288
      %v1290 = vlaneseq
      %v1291 = vshrl.u32 %v1290, 7
      %v1292 = vsub.s32 1, %v1291
      %v1293 = vrot.slane %v1258, %v1292
      %v1294 = vlaneseq
      %v1295 = vshrl.u32 %v1294, 7
      %v1296 = vsub.s32 2, %v1295
      %v1297 = vrot.slane %v1258, %v1296
      %v1298 = vlaneseq
      %v1299 = vshrl.u32 %v1298, 7
      %v1300 = vsub.s32 0, %v1299
      %v1301 = vrot.slane %v1260, %v1300
      %v1302 = vlaneseq
      %v1303 = vshrl.u32 %v1302, 7
      %v1304 = vsub.s32 1, %v1303
      %v1305 = vrot.slane %v1260, %v1304
      %v1306 = vlaneseq
      %v1307 = vshrl.u32 %v1306, 7
      %v1308 = vsub.s32 2, %v1307
      %v1309 = vrot.slane %v1260, %v1308
      %v1310 = vlaneseq
      %v1311 = vshrl.u32 %v1310, 7
      %v1312 = vsub.s32 0, %v1311
      %v1313 = vrot.slane %v1243, %v1312
      %v1314 = vlaneseq
      %v1315 = vshrl.u32 %v1314, 7
      %v1316 = vsub.s32 1, %v1315
      %v1317 = vrot.slane %v1243, %v1316
      %v1318 = vlaneseq
      %v1319 = vshrl.u32 %v1318, 7
      %v1320 = vsub.s32 2, %v1319
      %v1321 = vrot.slane %v1243, %v1320
      %v1322 = vlaneseq
      %v1323 = vshrl.u32 %v1322, 7
      %v1324 = vsub.s32 0, %v1323
      %v1325 = vrot.slane %v1257, %v1324
      %v1326 = vlaneseq
      %v1327 = vshrl.u32 %v1326, 7
      %v1328 = vsub.s32 1, %v1327
      %v1329 = vrot.slane %v1257, %v1328
      %v1330 = vlaneseq
      %v1331 = vshrl.u32 %v1330, 7
      %v1332 = vsub.s32 2, %v1331
      %v1333 = vrot.slane %v1257, %v1332
      %v1334 = vlaneseq
      %v1335 = vshrl.u32 %v1334, 7
      %v1336 = vsub.s32 0, %v1335
      %v1337 = vrot.slane %v1259, %v1336
      %v1338 = vlaneseq
      %v1339 = vshrl.u32 %v1338, 7
      %v1340 = vsub.s32 1, %v1339
      %v1341 = vrot.slane %v1259, %v1340
      %v1342 = vlaneseq
      %v1343 = vshrl.u32 %v1342, 7
      %v1344 = vsub.s32 2, %v1343
      %v1345 = vrot.slane %v1259, %v1344
      %v1346 = vlaneseq
      %v1347 = vshrl.u32 %v1346, 7
      %v1348 = vsub.s32 0, %v1347
      %v1349 = vrot.slane %v1261, %v1348
      %v1350 = vlaneseq
      %v1351 = vshrl.u32 %v1350, 7
      %v1352 = vsub.s32 1, %v1351
      %v1353 = vrot.slane %v1261, %v1352
      %v1354 = vlaneseq
      %v1355 = vshrl.u32 %v1354, 7
      %v1356 = vsub.s32 2, %v1355
      %v1357 = vrot.slane %v1261, %v1356
      %v1382 = vsub.f32 %v1265, %v1063
      %v1383 = vsub.f32 %v1269, %v1064
      %v1384 = vsub.f32 %v1273, %v1065
      %v1385 = vsub.f32 %v1277, %v1063
      %v1386 = vsub.f32 %v1281, %v1064
      %v1387 = vsub.f32 %v1285, %v1065
      %v1388 = vsub.f32 %v1289, %v1063
      %v1389 = vsub.f32 %v1293, %v1064
      %v1390 = vsub.f32 %v1297, %v1065
      %v1391 = vsub.f32 %v1301, %v1063
      %v1392 = vsub.f32 %v1305, %v1064
      %v1393 = vsub.f32 %v1309, %v1065
      %v1394 = vsub.f32 %v1313, %v1063
      %v1395 = vsub.f32 %v1317, %v1064
      %v1396 = vsub.f32 %v1321, %v1065
      %v1397 = vsub.f32 %v1325, %v1063
      %v1398 = vsub.f32 %v1329, %v1064
      %v1399 = vsub.f32 %v1333, %v1065
      %v1400 = vsub.f32 %v1337, %v1063
      %v1401 = vsub.f32 %v1341, %v1064
      %v1402 = vsub.f32 %v1345, %v1065
      %v1403 = vsub.f32 %v1349, %v1063
      %v1404 = vsub.f32 %v1353, %v1064
      %v1405 = vsub.f32 %v1357, %v1065
      %v1406 = vand.u32 2147483647, %v1382
      %v1407 = vand.u32 2147483647, %v1383
      %v1408 = vand.u32 2147483647, %v1384
      %v1409 = vand.u32 2147483647, %v1385
      %v1410 = vand.u32 2147483647, %v1386
      %v1411 = vand.u32 2147483647, %v1387
      %v1412 = vand.u32 2147483647, %v1388
      %v1413 = vand.u32 2147483647, %v1389
      %v1414 = vand.u32 2147483647, %v1390
      %v1415 = vand.u32 2147483647, %v1391
      %v1416 = vand.u32 2147483647, %v1392
      %v1417 = vand.u32 2147483647, %v1393
      %v1418 = vand.u32 2147483647, %v1394
      %v1419 = vand.u32 2147483647, %v1395
      %v1420 = vand.u32 2147483647, %v1396
      %v1421 = vand.u32 2147483647, %v1397
      %v1422 = vand.u32 2147483647, %v1398
      %v1423 = vand.u32 2147483647, %v1399
      %v1424 = vand.u32 2147483647, %v1400
      %v1425 = vand.u32 2147483647, %v1401
      %v1426 = vand.u32 2147483647, %v1402
      %v1427 = vand.u32 2147483647, %v1403
      %v1428 = vand.u32 2147483647, %v1404
      %v1429 = vand.u32 2147483647, %v1405
      %v1430 = vld [vmem:[#allocation11] sm:$0xff]
      %v1431 = vld [vmem:[#allocation11 + $0x8] sm:$0xff]
      %v1432 = vld [vmem:[#allocation11 + $0x10] sm:$0xff]
      %v1433 = vld [vmem:[#allocation11 + $0x18] sm:$0xff]
      %v1434 = vld [vmem:[#allocation11 + $0x20] sm:$0xff]
      %v1435 = vld [vmem:[#allocation11 + $0x28] sm:$0xff]
      %v1436 = vld [vmem:[#allocation11 + $0x30] sm:$0xff]
      %v1437 = vld [vmem:[#allocation11 + $0x38] sm:$0xff]
      %v1438 = vld [vmem:[#allocation11 + $0x40] sm:$0xff]
      %v1439 = vld [vmem:[#allocation11 + $0x48] sm:$0xff]
      %v1440 = vld [vmem:[#allocation11 + $0x50] sm:$0xff]
      %v1441 = vld [vmem:[#allocation11 + $0x58] sm:$0xff]
      %v1442 = vld [vmem:[#allocation11 + $0x60] sm:$0xff]
      %v1443 = vld [vmem:[#allocation11 + $0x68] sm:$0xff]
      %v1444 = vld [vmem:[#allocation11 + $0x70] sm:$0xff]
      %v1445 = vld [vmem:[#allocation11 + $0x78] sm:$0xff]
      %v1446 = vld [vmem:[#allocation11 + $0x80] sm:$0xff]
      %v1447 = vld [vmem:[#allocation11 + $0x88] sm:$0xff]
      %v1448 = vld [vmem:[#allocation11 + $0x90] sm:$0xff]
      %v1449 = vld [vmem:[#allocation11 + $0x98] sm:$0xff]
      %v1450 = vld [vmem:[#allocation11 + $0xa0] sm:$0xff]
      %v1451 = vld [vmem:[#allocation11 + $0xa8] sm:$0xff]
      %v1452 = vld [vmem:[#allocation11 + $0xb0] sm:$0xff]
      %v1453 = vld [vmem:[#allocation11 + $0xb8] sm:$0xff]
      %v1454 = vld [vmem:[#allocation11 + $0xc0] sm:$0xff]
      %v1455 = vld [vmem:[#allocation11 + $0xc8] sm:$0xff]
      %v1456 = vld [vmem:[#allocation11 + $0xd0] sm:$0xff]
      %v1457 = vld [vmem:[#allocation11 + $0xd8] sm:$0xff]
      %v1458 = vld [vmem:[#allocation11 + $0xe0] sm:$0xff]
      %v1459 = vld [vmem:[#allocation11 + $0xe8] sm:$0xff]
      %v1460 = vld [vmem:[#allocation11 + $0xf0] sm:$0xff]
      %v1461 = vld [vmem:[#allocation11 + $0xf8] sm:$0xff]
      %v1462 = vld [vmem:[#allocation11 + $0x100] sm:$0xff]
      %v1463 = vld [vmem:[#allocation11 + $0x108] sm:$0xff]
      %v1464 = vld [vmem:[#allocation11 + $0x110] sm:$0xff]
      %v1465 = vld [vmem:[#allocation11 + $0x118] sm:$0xff]
      %v1466 = vld [vmem:[#allocation11 + $0x120] sm:$0xff]
      %v1467 = vld [vmem:[#allocation11 + $0x128] sm:$0xff]
      %v1468 = vld [vmem:[#allocation11 + $0x130] sm:$0xff]
      %v1469 = vld [vmem:[#allocation11 + $0x138] sm:$0xff]
      %v1470 = vld [vmem:[#allocation11 + $0x140] sm:$0xff]
      %v1471 = vld [vmem:[#allocation11 + $0x148] sm:$0xff]
      %v1472 = vld [vmem:[#allocation11 + $0x150] sm:$0xff]
      %v1473 = vld [vmem:[#allocation11 + $0x158] sm:$0xff]
      %v1474 = vld [vmem:[#allocation11 + $0x160] sm:$0xff]
      %v1475 = vld [vmem:[#allocation11 + $0x168] sm:$0xff]
      %v1476 = vld [vmem:[#allocation11 + $0x170] sm:$0xff]
      %v1477 = vld [vmem:[#allocation11 + $0x178] sm:$0xff]
      %1478 = vmatprep.subr.mxu0 0.0
      %1479 = vmatpush1.msra.mxu0 %v1430
      %1480 = vmatprep.subr.mxu0 0.0
      %1481 = vmatpush1.msra.mxu0 %v1431
      %1482 = vmatprep.subr.mxu0 0.0
      %1483 = vmatpush1.msra.mxu0 %v1432
      %1484 = vmatprep.subr.mxu0 0.0
      %1485 = vmatpush1.msra.mxu0 %v1433
      %1486 = vmatprep.subr.mxu0 0.0
      %1487 = vmatpush1.msra.mxu0 %v1434
      %1488 = vmatprep.subr.mxu0 0.0
      %1489 = vmatpush1.msra.mxu0 %v1435
      %1490 = vmatprep.subr.mxu0 0.0
      %1491 = vmatpush1.msra.mxu0 %v1436
      %1492 = vmatprep.subr.mxu0 0.0
      %1493 = vmatpush1.msra.mxu0 %v1437
      %1494 = vmatprep.subr.mxu0 0.0
      %1495 = vmatpush1.msra.mxu0 %v1438
      %1496 = vmatprep.subr.mxu0 0.0
      %1497 = vmatpush1.msra.mxu0 %v1439
      %1498 = vmatprep.subr.mxu0 0.0
      %1499 = vmatpush1.msra.mxu0 %v1440
      %1500 = vmatprep.subr.mxu0 0.0
      %1501 = vmatpush1.msra.mxu0 %v1441
      %1502 = vmatprep.subr.mxu0 0.0
      %1503 = vmatpush1.msra.mxu0 %v1442
      %1504 = vmatprep.subr.mxu0 0.0
      %1505 = vmatpush1.msra.mxu0 %v1443
      %1506 = vmatprep.subr.mxu0 0.0
      %1507 = vmatpush1.msra.mxu0 %v1444
      %1508 = vmatprep.subr.mxu0 0.0
      %1509 = vmatpush1.msra.mxu0 %v1445
      %1510 = vmatprep.subr.mxu0 0.0
      %1511 = vmatpush1.msra.mxu0 %v1446
      %1512 = vmatprep.subr.mxu0 0.0
      %1513 = vmatpush1.msra.mxu0 %v1447
      %1514 = vmatprep.subr.mxu0 0.0
      %1515 = vmatpush1.msra.mxu0 %v1448
      %1516 = vmatprep.subr.mxu0 0.0
      %1517 = vmatpush1.msra.mxu0 %v1449
      %1518 = vmatprep.subr.mxu0 0.0
      %1519 = vmatpush1.msra.mxu0 %v1450
      %1520 = vmatprep.subr.mxu0 0.0
      %1521 = vmatpush1.msra.mxu0 %v1451
      %1522 = vmatprep.subr.mxu0 0.0
      %1523 = vmatpush1.msra.mxu0 %v1452
      %1524 = vmatprep.subr.mxu0 0.0
      %1525 = vmatpush1.msra.mxu0 %v1453
      %1526 = vmatprep.subr.mxu0 0.0
      %1527 = vmatpush1.msra.mxu0 %v1454
      %1528 = vmatprep.subr.mxu0 0.0
      %1529 = vmatpush1.msra.mxu0 %v1455
      %1530 = vmatprep.subr.mxu0 0.0
      %1531 = vmatpush1.msra.mxu0 %v1456
      %1532 = vmatprep.subr.mxu0 0.0
      %1533 = vmatpush1.msra.mxu0 %v1457
      %1534 = vmatprep.subr.mxu0 0.0
      %1535 = vmatpush1.msra.mxu0 %v1458
      %1536 = vmatprep.subr.mxu0 0.0
      %1537 = vmatpush1.msra.mxu0 %v1459
      %1538 = vmatprep.subr.mxu0 0.0
      %1539 = vmatpush1.msra.mxu0 %v1460
      %1540 = vmatprep.subr.mxu0 0.0
      %1541 = vmatpush1.msra.mxu0 %v1461
      %1542 = vmatprep.mubr.f32.mxu0 %v1407
      %1543 = vmatmul.mubr.f32.gmra.mrb[0].mxu0 %v1406
      %v1544 = vpop.f32.mrb[0].mxu0
      %v1545 = vadd.f32 0.0, %v1544
      %v1546 = vpop.f32.mrb[0].mxu0
      %1547 = vmatprep.mubr.f32.mxu0 %v1410
      %1548 = vmatmul.mubr.f32.gmra.mrb[0].mxu0 %v1409
      %v1549 = vpop.f32.mrb[0].mxu0
      %v1550 = vadd.f32 0.0, %v1549
      %v1551 = vpop.f32.mrb[0].mxu0
      %1552 = vmatprep.mubr.f32.mxu0 %v1413
      %1553 = vmatmul.mubr.f32.gmra.mrb[0].mxu0 %v1412
      %v1554 = vpop.f32.mrb[0].mxu0
      %v1555 = vadd.f32 0.0, %v1554
      %v1556 = vpop.f32.mrb[0].mxu0
      %1557 = vmatprep.mubr.f32.mxu0 %v1416
      %1558 = vmatmul.mubr.f32.gmra.mrb[0].mxu0 %v1415
      %v1559 = vpop.f32.mrb[0].mxu0
      %v1560 = vadd.f32 0.0, %v1559
      %v1561 = vpop.f32.mrb[0].mxu0
      %1562 = vmatprep.mubr.f32.mxu0 %v1419
      %1563 = vmatmul.mubr.f32.gmra.mrb[0].mxu0 %v1418
      %v1564 = vpop.f32.mrb[0].mxu0
      %v1565 = vadd.f32 0.0, %v1564
      %v1566 = vpop.f32.mrb[0].mxu0
      %1567 = vmatprep.mubr.f32.mxu0 %v1422
      %1568 = vmatmul.mubr.f32.gmra.mrb[0].mxu0 %v1421
      %v1569 = vpop.f32.mrb[0].mxu0
      %v1570 = vadd.f32 0.0, %v1569
      %v1571 = vpop.f32.mrb[0].mxu0
      %1572 = vmatprep.mubr.f32.mxu0 %v1425
      %1573 = vmatmul.mubr.f32.gmra.mrb[0].mxu0 %v1424
      %v1574 = vpop.f32.mrb[0].mxu0
      %v1575 = vadd.f32 0.0, %v1574
      %v1576 = vpop.f32.mrb[0].mxu0
      %1577 = vmatprep.mubr.f32.mxu0 %v1428
      %1578 = vmatmul.mubr.f32.gmra.mrb[0].mxu0 %v1427
      %v1579 = vpop.f32.mrb[0].mxu0
      %v1580 = vadd.f32 0.0, %v1579
      %v1581 = vpop.f32.mrb[0].mxu0
      %1582 = vdwg.mxu0
      %1583 = vmatprep.subr.mxu0 0.0
      %1584 = vmatpush1.msra.mxu0 %v1462
      %1585 = vmatprep.subr.mxu0 0.0
      %1586 = vmatpush1.msra.mxu0 %v1463
      %1587 = vmatprep.subr.mxu0 0.0
      %1588 = vmatpush1.msra.mxu0 %v1464
      %1589 = vmatprep.subr.mxu0 0.0
      %1590 = vmatpush1.msra.mxu0 %v1465
      %1591 = vmatprep.subr.mxu0 0.0
      %1592 = vmatpush1.msra.mxu0 %v1466
      %1593 = vmatprep.subr.mxu0 0.0
      %1594 = vmatpush1.msra.mxu0 %v1467
      %1595 = vmatprep.subr.mxu0 0.0
      %1596 = vmatpush1.msra.mxu0 %v1468
      %1597 = vmatprep.subr.mxu0 0.0
      %1598 = vmatpush1.msra.mxu0 %v1469
      %1599 = vmatprep.subr.mxu0 0.0
      %1600 = vmatpush1.msra.mxu0 %v1470
      %1601 = vmatprep.subr.mxu0 0.0
      %1602 = vmatpush1.msra.mxu0 %v1471
      %1603 = vmatprep.subr.mxu0 0.0
      %1604 = vmatpush1.msra.mxu0 %v1472
      %1605 = vmatprep.subr.mxu0 0.0
      %1606 = vmatpush1.msra.mxu0 %v1473
      %1607 = vmatprep.subr.mxu0 0.0
      %1608 = vmatpush1.msra.mxu0 %v1474
      %1609 = vmatprep.subr.mxu0 0.0
      %1610 = vmatpush1.msra.mxu0 %v1475
      %1611 = vmatprep.subr.mxu0 0.0
      %1612 = vmatpush1.msra.mxu0 %v1476
      %1613 = vmatprep.subr.mxu0 0.0
      %1614 = vmatpush1.msra.mxu0 %v1477
      %1615 = vmatprep.subr.mxu0 0.0
      %1616 = vmatpush1.msra.mxu0 0.0
      %1617 = vmatprep.subr.mxu0 0.0
      %1618 = vmatpush1.msra.mxu0 0.0
      %1619 = vmatprep.subr.mxu0 0.0
      %1620 = vmatpush1.msra.mxu0 0.0
      %1621 = vmatprep.subr.mxu0 0.0
      %1622 = vmatpush1.msra.mxu0 0.0
      %1623 = vmatprep.subr.mxu0 0.0
      %1624 = vmatpush1.msra.mxu0 0.0
      %1625 = vmatprep.subr.mxu0 0.0
      %1626 = vmatpush1.msra.mxu0 0.0
      %1627 = vmatprep.subr.mxu0 0.0
      %1628 = vmatpush1.msra.mxu0 0.0
      %1629 = vmatprep.subr.mxu0 0.0
      %1630 = vmatpush1.msra.mxu0 0.0
      %1631 = vmatprep.subr.mxu0 0.0
      %1632 = vmatpush1.msra.mxu0 0.0
      %1633 = vmatprep.subr.mxu0 0.0
      %1634 = vmatpush1.msra.mxu0 0.0
      %1635 = vmatprep.subr.mxu0 0.0
      %1636 = vmatpush1.msra.mxu0 0.0
      %1637 = vmatprep.subr.mxu0 0.0
      %1638 = vmatpush1.msra.mxu0 0.0
      %1639 = vmatprep.subr.mxu0 0.0
      %1640 = vmatpush1.msra.mxu0 0.0
      %1641 = vmatprep.subr.mxu0 0.0
      %1642 = vmatpush1.msra.mxu0 0.0
      %1643 = vmatprep.subr.mxu0 0.0
      %1644 = vmatpush1.msra.mxu0 0.0
      %1645 = vmatprep.subr.mxu0 0.0
      %1646 = vmatpush1.msra.mxu0 0.0
      %1647 = vmatprep.mubr.f32.mxu0 0.0
      %1648 = vmatmul.mubr.f32.gmra.mrb[0].mxu0 %v1408
      %v1649 = vpop.f32.mrb[0].mxu0
      %v1650 = vadd.f32 %v1545, %v1649
      %v1651 = vpop.f32.mrb[0].mxu0
      %1652 = vmatprep.mubr.f32.mxu0 0.0
      %1653 = vmatmul.mubr.f32.gmra.mrb[0].mxu0 %v1411
      %v1654 = vpop.f32.mrb[0].mxu0
      %v1655 = vadd.f32 %v1550, %v1654
      %v1656 = vpop.f32.mrb[0].mxu0
      %1657 = vmatprep.mubr.f32.mxu0 0.0
      %1658 = vmatmul.mubr.f32.gmra.mrb[0].mxu0 %v1414
      %v1659 = vpop.f32.mrb[0].mxu0
      %v1660 = vadd.f32 %v1555, %v1659
      %v1661 = vpop.f32.mrb[0].mxu0
      %1662 = vmatprep.mubr.f32.mxu0 0.0
      %1663 = vmatmul.mubr.f32.gmra.mrb[0].mxu0 %v1417
      %v1664 = vpop.f32.mrb[0].mxu0
      %v1665 = vadd.f32 %v1560, %v1664
      %v1666 = vpop.f32.mrb[0].mxu0
      %1667 = vmatprep.mubr.f32.mxu0 0.0
      %1668 = vmatmul.mubr.f32.gmra.mrb[0].mxu0 %v1420
      %v1669 = vpop.f32.mrb[0].mxu0
      %v1670 = vadd.f32 %v1565, %v1669
      %v1671 = vpop.f32.mrb[0].mxu0
      %1672 = vmatprep.mubr.f32.mxu0 0.0
      %1673 = vmatmul.mubr.f32.gmra.mrb[0].mxu0 %v1423
      %v1674 = vpop.f32.mrb[0].mxu0
      %v1675 = vadd.f32 %v1570, %v1674
      %v1676 = vpop.f32.mrb[0].mxu0
      %1677 = vmatprep.mubr.f32.mxu0 0.0
      %1678 = vmatmul.mubr.f32.gmra.mrb[0].mxu0 %v1426
      %v1679 = vpop.f32.mrb[0].mxu0
      %v1680 = vadd.f32 %v1575, %v1679
      %v1681 = vpop.f32.mrb[0].mxu0
      %1682 = vmatprep.mubr.f32.mxu0 0.0
      %1683 = vmatmul.mubr.f32.gmra.mrb[0].mxu0 %v1429
      %v1684 = vpop.f32.mrb[0].mxu0
      %v1685 = vadd.f32 %v1580, %v1684
      %v1686 = vpop.f32.mrb[0].mxu0
      %1687 = vdwg.mxu0
      %v1688 = vsub.f32 0.0, %v1650
      %v1689 = vsub.f32 0.0, %v1655
      %v1690 = vsub.f32 0.0, %v1660
      %v1691 = vsub.f32 0.0, %v1665
      %v1692 = vsub.f32 0.0, %v1670
      %v1693 = vsub.f32 0.0, %v1675
      %v1694 = vsub.f32 0.0, %v1680
      %v1695 = vsub.f32 0.0, %v1685
      %v1696 = vmul.f32 %v1688, 1.442695
      %v1697 = vpow.pop %v1696
      %v1698 = vmul.f32 %v1689, 1.442695
      %v1699 = vpow.pop %v1698
      %v1700 = vmul.f32 %v1690, 1.442695
      %v1701 = vpow.pop %v1700
      %v1702 = vmul.f32 %v1691, 1.442695
      %v1703 = vpow.pop %v1702
      %v1704 = vmul.f32 %v1692, 1.442695
      %v1705 = vpow.pop %v1704
      %v1706 = vmul.f32 %v1693, 1.442695
      %v1707 = vpow.pop %v1706
      %v1708 = vmul.f32 %v1694, 1.442695
      %v1709 = vpow.pop %v1708
      %v1710 = vmul.f32 %v1695, 1.442695
      %v1711 = vpow.pop %v1710
      %v1712 = vlaneseq
      %v1713 = vshrl.u32 %v1712, 7
      %v1714 = vstv %s1061
      %vm1715 = vcmp.lt.s32.totalorder %v1713, %v1714
      %v1716 = vsel %vm1715, %v1697, 0.0
      %v1717 = vsel %vm1715, %v1699, 0.0
      %v1718 = vsel %vm1715, %v1701, 0.0
      %v1719 = vsel %vm1715, %v1703, 0.0
      %v1720 = vsel %vm1715, %v1705, 0.0
      %v1721 = vsel %vm1715, %v1707, 0.0
      %v1722 = vsel %vm1715, %v1709, 0.0
      %v1723 = vsel %vm1715, %v1711, 0.0
      %v1724 = vrot.slane %v1716, 4
      %v1725 = vadd.f32 %v1716, %v1724
      %v1726 = vrot.slane %v1725, 2
      %v1727 = vadd.f32 %v1725, %v1726
      %v1728 = vrot.slane %v1727, 1
      %v1729 = vadd.f32 %v1727, %v1728
      %v1730 = vrot.slane %v1717, 4
      %v1731 = vadd.f32 %v1717, %v1730
      %v1732 = vrot.slane %v1731, 2
      %v1733 = vadd.f32 %v1731, %v1732
      %v1734 = vrot.slane %v1733, 1
      %v1735 = vadd.f32 %v1733, %v1734
      %v1736 = vrot.slane %v1718, 4
      %v1737 = vadd.f32 %v1718, %v1736
      %v1738 = vrot.slane %v1737, 2
      %v1739 = vadd.f32 %v1737, %v1738
      %v1740 = vrot.slane %v1739, 1
      %v1741 = vadd.f32 %v1739, %v1740
      %v1742 = vrot.slane %v1719, 4
      %v1743 = vadd.f32 %v1719, %v1742
      %v1744 = vrot.slane %v1743, 2
      %v1745 = vadd.f32 %v1743, %v1744
      %v1746 = vrot.slane %v1745, 1
      %v1747 = vadd.f32 %v1745, %v1746
      %v1748 = vrot.slane %v1720, 4
      %v1749 = vadd.f32 %v1720, %v1748
      %v1750 = vrot.slane %v1749, 2
      %v1751 = vadd.f32 %v1749, %v1750
      %v1752 = vrot.slane %v1751, 1
      %v1753 = vadd.f32 %v1751, %v1752
      %v1754 = vrot.slane %v1721, 4
      %v1755 = vadd.f32 %v1721, %v1754
      %v1756 = vrot.slane %v1755, 2
      %v1757 = vadd.f32 %v1755, %v1756
      %v1758 = vrot.slane %v1757, 1
      %v1759 = vadd.f32 %v1757, %v1758
      %v1760 = vrot.slane %v1722, 4
      %v1761 = vadd.f32 %v1722, %v1760
      %v1762 = vrot.slane %v1761, 2
      %v1763 = vadd.f32 %v1761, %v1762
      %v1764 = vrot.slane %v1763, 1
      %v1765 = vadd.f32 %v1763, %v1764
      %v1766 = vrot.slane %v1723, 4
      %v1767 = vadd.f32 %v1723, %v1766
      %v1768 = vrot.slane %v1767, 2
      %v1769 = vadd.f32 %v1767, %v1768
      %v1770 = vrot.slane %v1769, 1
      %v1771 = vadd.f32 %v1769, %v1770
      %v1772 = vsub.f32 %v1729, 1.0
      %v1773 = vsub.f32 %v1735, 1.0
      %v1774 = vsub.f32 %v1741, 1.0
      %v1775 = vsub.f32 %v1747, 1.0
      %v1776 = vsub.f32 %v1753, 1.0
      %v1777 = vsub.f32 %v1759, 1.0
      %v1778 = vsub.f32 %v1765, 1.0
      %v1779 = vsub.f32 %v1771, 1.0
      %v1780 = vlaneseq
      %v1781 = vand.u32 %v1780, 127
      %vm1782 = vcmp.lt.s32.totalorder %v1781, 48
      %vm1791 = vcmask 1041409
      %v1792 = vsel %vm1791, %v1773, %v1772
      %vm1793 = vcmask 1042434
      %v1794 = vsel %vm1793, %v1774, %v1792
      %vm1795 = vcmask 1043459
      %v1796 = vsel %vm1795, %v1775, %v1794
      %vm1797 = vcmask 1044484
      %v1798 = vsel %vm1797, %v1776, %v1796
      %vm1799 = vcmask 1045509
      %v1800 = vsel %vm1799, %v1777, %v1798
      %vm1801 = vcmask 1046534
      %v1802 = vsel %vm1801, %v1778, %v1800
      %vm1803 = vcmask 1047559
      %v1804 = vsel %vm1803, %v1779, %v1802
      %v1806 = vsel %vm1782, %v1804, 0.0
      %v1807 = vld [vmem:[%s7] sm:$0x1]
      %v1809 = vlaneseq
      %v1810 = vshrl.u32 %v1809, 7
      %v1811 = vsub.s32 0, %v1810
      %v1812 = vrot.slane %v1807, %v1811
      %v1814 = vmul.f32 %v1191, %v1812
      %1815 = vadd.xlane.f32.xlu0 %v1814
      %v1816 = vpop.xlane.xlu0 %1815
      %v1817 = vld [vmem:[%s8] sm:$0x1]
      %v1819 = vlaneseq
      %v1820 = vshrl.u32 %v1819, 7
      %v1821 = vsub.s32 0, %v1820
      %v1822 = vrot.slane %v1817, %v1821
      %v1824 = vmul.f32 %v1806, %v1822
      %1825 = vadd.xlane.f32.xlu0 %v1824
      %v1826 = vpop.xlane.xlu0 %1825
      %v1827 = vadd.f32 %v1816, %v1826
      %v1828 = vld [vmem:[#allocation5] sm:$0x1]
      %v1830 = vlaneseq
      %v1831 = vshrl.u32 %v1830, 7
      %v1832 = vsub.s32 0, %v1831
      %v1833 = vrot.slane %v1828, %v1832
      %v1835 = vadd.f32 %v1827, %v1833
      %v1836 = vsub.f32 0.0, %v1835
      %v1837 = vmul.f32 %v1836, 1.442695
      %v1838 = vpow.pop %v1837
      %v1839 = vadd.f32 %v1838, 1.0
      %v1840 = vrcp.pop %v1839
      %v1841 = vmul.f32 1.0, %v1840
      %vm1842 = vcmask 7168
      %1843 = vst.msk [vmem:[%s10] sm:$0xff] %vm1842, %v1841
    $region61: #{tpu_custom_call.1} parent=1 // pred_fallthru
      _
    // Predicated region
    $region62: #{tpu_custom_call.1} parent=1 // pred_check
      _
    $region63: #{tpu_custom_call.1} parent=1 // pred_check_branch
      %1845 = sbr.rel (0) target = $region65
    $region64: #{tpu_custom_call.1} parent=1 // pred_region
      _
    $region65: #{tpu_custom_call.1} parent=1 // pred_fallthru
      _
    // Predicated region
    $region66: #{tpu_custom_call.1} parent=1 // pred_check
      _
    $region67: #{tpu_custom_call.1} parent=1 // pred_check_branch
      %1847 = sbr.rel (0) target = $region69
    $region68: #{tpu_custom_call.1} parent=1 // pred_region
      _
    $region69: #{tpu_custom_call.1} parent=1 // pred_fallthru
      _
    %1848 = vsyncpa [#allocation7], 1
    %1849 = vsyncpa [#allocation9], 1
    %1850 = vsyncpa [#allocation12], 1

</llo_original>
